<compile_context>
chip_gen: v7x
topology: tpu7x:2x2x1
jax: 0.10.0
libtpu: 0.0.40
codegen_flags: <defaults>
</compile_context>

<pallas_src>
import functools
import math

import jax
import jax.numpy as jnp
from jax.experimental import pallas as pl
from jax.experimental.pallas import tpu as pltpu


def _layernorm(x, gamma, beta, eps=1e-5):
    mu = jnp.mean(x, axis=-1, keepdims=True)
    var = jnp.mean((x - mu) ** 2, axis=-1, keepdims=True)
    return (x - mu) * jax.lax.rsqrt(var + eps) * gamma + beta


def _gelu_exact(x):
    return 0.5 * x * (1.0 + jax.lax.erf(x * (1.0 / math.sqrt(2.0))))


def latent_mlp_kernel(
    x_ref,                               # (TILE_B*T, D)  streamed latent rows
    w1_ref, b1_ref, g1_ref, be1_ref,     # token_mlp: Linear(D,H), LayerNorm(H)
    w2_ref, b2_ref, g2_ref, be2_ref,     # final_mlp: Linear(H,H), LayerNorm(H)
    w3_ref,                              # (1, H)  final Linear(H,1) weight as a row
    b3_ref,                              # (1, 1)  scalar bias in SMEM
    out_ref,                             # (1, 1, TILE_B)  lane-dense output row
    *, num_tokens,
):
    # ---- token_mlp: Linear -> LayerNorm -> GELU -> Dropout(identity) ----
    # The streamed tile is cast to the matmul dtype *inside* the kernel
    # (VMEM-local, no extra HBM traffic); f32 accumulation on the MXU.
    x = x_ref[...]
    h = jnp.dot(x.astype(w1_ref.dtype), w1_ref[...],
                preferred_element_type=jnp.float32)
    h = h + b1_ref[...]
    h = _layernorm(h, g1_ref[...], be1_ref[...])
    h = _gelu_exact(h)

    # ---- mean pool over tokens (dim=1): sublane reduce, no pooling matrix ----
    # (Numerically exact; if T is not a sublane multiple this reshape may
    #  materialize a small VMEM copy, which is acceptable.)
    rows, H = h.shape
    tile_b = rows // num_tokens
    pooled = jnp.mean(h.reshape(tile_b, num_tokens, H), axis=1)      # (TILE_B, H) f32

    # ---- final_mlp: Linear -> LayerNorm -> GELU -> Dropout(identity) -> Linear ----
    z = jnp.dot(pooled.astype(w2_ref.dtype), w2_ref[...],
                preferred_element_type=jnp.float32)
    z = z + b2_ref[...]
    z = _layernorm(z, g2_ref[...], be2_ref[...])
    z = _gelu_exact(z)

    # N=1 "matmul" on the VPU (+ lane reduce); write a lane-dense (1, TILE_B) row.
    out_row = jnp.sum(z * w3_ref[...], axis=-1) + b3_ref[0, 0]       # (TILE_B,)
    out_ref[...] = out_row.reshape(out_ref.shape).astype(out_ref.dtype)


# Lazily probed: does this jax accept pipeline_mode=pl.Buffered(1) on BlockSpec?
_SINGLE_BUFFER_WEIGHTS = None


def _tpu_vmem_caps():
    """(vmem_limit cap, tile budget) in bytes, generation aware.

    v4/v5e/v6e have 128 MiB VMEM per TensorCore; v7x has only 64 MiB per TC (and
    the budget is per-TC since each core keeps its own resident weight copy), so
    we stay conservative for v7x / unknown generations.
    """
    kind = ""
    try:
        kind = (jax.devices()[0].device_kind or "").lower()
    except Exception:
        pass
    if ("v4" in kind) or ("v5" in kind) or ("v6" in kind):
        return 100 * 1024 * 1024, 88 * 1024 * 1024
    return 56 * 1024 * 1024, 44 * 1024 * 1024


def _estimate_vmem_bytes(tile_b, T, D, H, x_itemsize, mm_itemsize):
    """Conservative per-grid-step VMEM footprint (x stream + weights + h)."""
    rows = tile_b * T
    x_blocks = 2 * rows * D * x_itemsize            # double-buffered streamed x tile
    h_scratch = rows * H * 4                        # f32 (rows, H) intermediate
    weights = 2 * (D * H + H * H) * mm_itemsize     # w1/w2 (assume 2 buffers even if Buffered(1))
    small = 2 * (7 * 8 * H + 8 * 128) * 4           # LN params / biases / w3 / out (padded)
    return x_blocks + h_scratch + weights + small


def _choose_tile_b(B, T, D, H, x_itemsize, mm_itemsize, budget_bytes):
    """Largest batch tile whose full VMEM footprint fits the budget.

    Prefers big streamed blocks (HBM roofline + MXU M dimension).  Alignment:
    rows = tile_b*T must be a sublane multiple (8 for f32, 16 for 16-bit dtypes)
    unless the tile covers the whole flattened array.
    """
    sub = 16 if x_itemsize == 2 else 8
    candidates = [tb for tb in range(1, B + 1)
                  if B % tb == 0 and (tb == B or (tb * T) % sub == 0)]
    fitting = [tb for tb in sorted(candidates, reverse=True)
               if _estimate_vmem_bytes(tb, T, D, H, x_itemsize, mm_itemsize) <= budget_bytes]
    if not fitting:
        # Nothing fits the stated budget: return the smallest aligned tile; the
        # caller bumps vmem_limit_bytes accordingly and errors loudly if even
        # that exceeds the per-generation cap (no more silent overruns).
        return min(candidates)
    best = fitting[0]
    # v7x megacore: prefer an even number of grid steps when each tile is still
    # a large (>= 1024-row) streamed block.
    if best == B and (B // 2) in fitting and (B // 2) * T >= 1024:
        best = B // 2
    return best


def latent_mlp(latent, params, *, tile_b=None, use_bf16_matmul=None):
    """latent: [B, T, D] -> [B, 1]  (eval-mode LatentMLP forward)."""
    global _SINGLE_BUFFER_WEIGHTS

    B, T, D = latent.shape
    H = params["w1"].shape[1]

    # bf16 matmul path: ON automatically when the latent already arrives in bf16
    # (no wrapper-side recast of the dominant HBM stream).  For f32 latents the
    # x stream stays f32 in HBM and is cast to bf16 only inside the kernel.
    if use_bf16_matmul is None:
        use_bf16_matmul = latent.dtype == jnp.bfloat16
    mm_dtype = jnp.bfloat16 if use_bf16_matmul else jnp.float32
    # TODO(synk): on v7x an fp8 path for x/w1 would halve the x stream again,
    # but needs a real quantization scheme (scales), so it is not implemented.

    # NOTE: no .astype on x -- the big stream keeps its input dtype in HBM.
    x = latent.reshape(B * T, D)
    w1 = params["w1"].astype(mm_dtype)                     # small, one-time casts
    w2 = params["w2"].astype(mm_dtype)
    w3 = params["w3"].reshape(1, H).astype(jnp.float32)    # (H,1) -> (1,H) row
    b3 = params["b3"].reshape(1, 1).astype(jnp.float32)
    b1 = params["b1"].reshape(1, H).astype(jnp.float32)
    g1 = params["g1"].reshape(1, H).astype(jnp.float32)
    be1 = params["beta1"].reshape(1, H).astype(jnp.float32)
    b2 = params["b2"].reshape(1, H).astype(jnp.float32)
    g2 = params["g2"].reshape(1, H).astype(jnp.float32)
    be2 = params["beta2"].reshape(1, H).astype(jnp.float32)

    x_itemsize = x.dtype.itemsize
    mm_itemsize = jnp.dtype(mm_dtype).itemsize
    vmem_cap, vmem_budget = _tpu_vmem_caps()

    if tile_b is None:
        tile_b = _choose_tile_b(B, T, D, H, x_itemsize, mm_itemsize, vmem_budget)
    sub = 16 if x_itemsize == 2 else 8
    assert B % tile_b == 0, (B, tile_b)
    rows = tile_b * T
    assert rows == B * T or rows % sub == 0, (tile_b, T, sub)
    num_tiles = B // tile_b

    est = _estimate_vmem_bytes(tile_b, T, D, H, x_itemsize, mm_itemsize)
    if est > vmem_cap:
        raise ValueError(
            f"tile_b={tile_b} needs ~{est >> 20} MiB of VMEM, above the "
            f"{vmem_cap >> 20} MiB cap for this TPU generation; use a smaller tile_b.")
    vmem_limit = int(min(vmem_cap, max(32 * 1024 * 1024, est + (8 << 20))))

    cost = pl.CostEstimate(
        flops=int(2 * B * T * D * H + 2 * B * H * H + 2 * B * H),
        transcendentals=int(B * T * H + B * H),
        bytes_accessed=int(B * T * D * x_itemsize
                           + (D * H + H * H) * mm_itemsize
                           + (8 * H + 1) * 4
                           + B * 4),
    )

    kernel = functools.partial(latent_mlp_kernel, num_tokens=T)

    def build(single_buffer_weights):
        def resident(shape):
            # Constant-index weights / LN params stay in VMEM across grid steps;
            # single-buffer them (block index never changes) so they don't double
            # their VMEM footprint.
            if single_buffer_weights:
                return pl.BlockSpec(shape, lambda i: (0, 0),
                                    pipeline_mode=pl.Buffered(1))
            return pl.BlockSpec(shape, lambda i: (0, 0))

        in_specs = [
            pl.BlockSpec((rows, D), lambda i: (i, 0)),          # x: streamed batch tile
            resident((D, H)), resident((1, H)), resident((1, H)), resident((1, H)),
            resident((H, H)), resident((1, H)), resident((1, H)), resident((1, H)),
            resident((1, H)),                                   # w3 row, resident
            pl.BlockSpec(memory_space=pltpu.MemorySpace.SMEM),  # b3 scalar in SMEM
        ]
        # Lane-dense output: one (1, tile_b) lane-row per grid step (block equals
        # the full last-two dims of the (num_tiles, 1, tile_b) slab).
        out_specs = pl.BlockSpec((1, 1, tile_b), lambda i: (i, 0, 0))

        return pl.pallas_call(
            kernel,
            out_shape=jax.ShapeDtypeStruct((num_tiles, 1, tile_b), jnp.float32),
            grid=(num_tiles,),
            in_specs=in_specs,
            out_specs=out_specs,
            compiler_params=pltpu.CompilerParams(
                dimension_semantics=("parallel",),
                vmem_limit_bytes=vmem_limit,
            ),
            cost_estimate=cost,
        )

    args = (x, w1, b1, g1, be1, w2, b2, g2, be2, w3, b3)

    if _SINGLE_BUFFER_WEIGHTS is None:
        try:
            out3d = build(True)(*args)
            _SINGLE_BUFFER_WEIGHTS = True
        except Exception:
            # Older jax without BlockSpec(pipeline_mode=...) / Buffered(1):
            # fall back to default double-buffered resident weights.
            _SINGLE_BUFFER_WEIGHTS = False
            out3d = build(False)(*args)
    else:
        out3d = build(_SINGLE_BUFFER_WEIGHTS)(*args)

    # Tiles are contiguous batch blocks, so a plain reshape restores batch order.
    return out3d.reshape(B, 1).astype(latent.dtype)


def latent_mlp_reference(latent, params):
    """Pure-JAX reference (mirrors the PyTorch forward in eval mode)."""
    h = latent @ params["w1"] + params["b1"]
    h = _layernorm(h, params["g1"], params["beta1"])
    h = _gelu_exact(h)
    pooled = jnp.mean(h, axis=1)
    z = pooled @ params["w2"] + params["b2"]
    z = _layernorm(z, params["g2"], params["beta2"])
    z = _gelu_exact(z)
    return z @ params["w3"] + params["b3"]


# TODO(synk): Dropout is identity (eval-mode); training-mode dropout would need pltpu PRNG.


if __name__ == "__main__":
    # Small shapes consistent with the module's forward:
    # latent [B, T, D], token MLP D->H, final MLP H->H->1.
    B, T, D, H = 16, 8, 256, 128

    key = jax.random.PRNGKey(0)
    keys = jax.random.split(key, 8)

    params = {
        # weights stored as (in, out) = transpose of torch's Linear.weight
        "w1": jax.random.normal(keys[0], (D, H), jnp.float32) * 0.02,
        "b1": jax.random.normal(keys[1], (1, H), jnp.float32) * 0.02,
        "g1": jnp.ones((1, H), jnp.float32),
        "beta1": jnp.zeros((1, H), jnp.float32),
        "w2": jax.random.normal(keys[2], (H, H), jnp.float32) * 0.02,
        "b2": jax.random.normal(keys[3], (1, H), jnp.float32) * 0.02,
        "g2": jnp.ones((1, H), jnp.float32),
        "beta2": jnp.zeros((1, H), jnp.float32),
        "w3": jax.random.normal(keys[4], (H, 1), jnp.float32) * 0.02,
        "b3": jax.random.normal(keys[5], (1, 1), jnp.float32) * 0.02,
    }

    latent = jax.random.normal(keys[6], (B, T, D), jnp.float32)
    ref = latent_mlp_reference(latent, params)

    # Forced 2-step batch-tiled grid (streamed x tiles, resident weights,
    # lane-dense output slab written across grid steps).
    out = latent_mlp(latent, params, tile_b=8)
    jax.block_until_ready(out)
    assert out.shape == (B, 1), out.shape
    assert jnp.allclose(out, ref, atol=1e-4, rtol=1e-4), (out, ref)

    # Auto tile selection against the generation-aware VMEM budget.
    out_auto = latent_mlp(latent, params)
    jax.block_until_ready(out_auto)
    assert out_auto.shape == (B, 1), out_auto.shape
    assert jnp.allclose(out_auto, ref, atol=1e-4, rtol=1e-4), (out_auto, ref)

    # bf16 end-to-end input: the x stream stays bf16 in HBM (no wrapper recast),
    # bf16 matmuls with f32 accumulation / f32 LayerNorm+GELU.
    out_bf16 = latent_mlp(latent.astype(jnp.bfloat16), params, tile_b=8)
    jax.block_until_ready(out_bf16)
    assert jnp.allclose(out_bf16.astype(jnp.float32), ref, atol=5e-2, rtol=5e-2), (
        out_bf16, ref)

    # f32 input with explicit bf16 matmuls: x is cast to bf16 only inside the
    # kernel (VMEM-local), never in the wrapper.
    out_mixed = latent_mlp(latent, params, tile_b=8, use_bf16_matmul=True)
    jax.block_until_ready(out_mixed)
    assert jnp.allclose(out_mixed, ref, atol=5e-2, rtol=5e-2), (out_mixed, ref)

    print("KERNEL_OK")
</pallas_src>

<mosaic_0001>
module attributes {stable_mosaic.version = 11 : i64} {
  func.func @latent_mlp_kernel(%arg0: i32, %arg1: memref<64x256xf32, #tpu.memory_space<vmem>>, %arg2: memref<256x128xf32, #tpu.memory_space<vmem>>, %arg3: memref<1x128xf32, #tpu.memory_space<vmem>>, %arg4: memref<1x128xf32, #tpu.memory_space<vmem>>, %arg5: memref<1x128xf32, #tpu.memory_space<vmem>>, %arg6: memref<128x128xf32, #tpu.memory_space<vmem>>, %arg7: memref<1x128xf32, #tpu.memory_space<vmem>>, %arg8: memref<1x128xf32, #tpu.memory_space<vmem>>, %arg9: memref<1x128xf32, #tpu.memory_space<vmem>>, %arg10: memref<1x128xf32, #tpu.memory_space<vmem>>, %arg11: memref<1x1xf32, #tpu.memory_space<smem>>, %arg12: memref<1x1x8xf32, #tpu.memory_space<vmem>>) attributes {dimension_semantics = [#tpu.dimension_semantics<parallel>], iteration_bounds = array<i64: 2>, scalar_prefetch = 0 : i64, scratch_operands = 0 : i64, tpu.core_type = #tpu.core_type<tc>, window_params = [{transform_indices = @transform_0, window_bounds = array<i64: 64, 256>}, {pipeline_mode = #tpu.pipeline_mode<synchronous>, transform_indices = @transform_1, window_bounds = array<i64: 256, 128>}, {pipeline_mode = #tpu.pipeline_mode<synchronous>, transform_indices = @transform_2, window_bounds = array<i64: 1, 128>}, {pipeline_mode = #tpu.pipeline_mode<synchronous>, transform_indices = @transform_3, window_bounds = array<i64: 1, 128>}, {pipeline_mode = #tpu.pipeline_mode<synchronous>, transform_indices = @transform_4, window_bounds = array<i64: 1, 128>}, {pipeline_mode = #tpu.pipeline_mode<synchronous>, transform_indices = @transform_5, window_bounds = array<i64: 128, 128>}, {pipeline_mode = #tpu.pipeline_mode<synchronous>, transform_indices = @transform_6, window_bounds = array<i64: 1, 128>}, {pipeline_mode = #tpu.pipeline_mode<synchronous>, transform_indices = @transform_7, window_bounds = array<i64: 1, 128>}, {pipeline_mode = #tpu.pipeline_mode<synchronous>, transform_indices = @transform_8, window_bounds = array<i64: 1, 128>}, {pipeline_mode = #tpu.pipeline_mode<synchronous>, transform_indices = @transform_9, window_bounds = array<i64: 1, 128>}, {transform_indices = @transform_10, window_bounds = array<i64: 1, 1>}, {transform_indices = @transform_11, window_bounds = array<i64: 1, 1, 8>}]} {
    %c0 = arith.constant 0 : index
    %c0_0 = arith.constant 0 : index
    %0 = vector.load %arg1[%c0, %c0_0] : memref<64x256xf32, #tpu.memory_space<vmem>>, vector<64x256xf32>
    %c0_1 = arith.constant 0 : index
    %c0_2 = arith.constant 0 : index
    %1 = vector.load %arg2[%c0_1, %c0_2] : memref<256x128xf32, #tpu.memory_space<vmem>>, vector<256x128xf32>
    %cst = arith.constant dense<0.000000e+00> : vector<64x128xf32>
    %2 = tpu.matmul %0, %1, %cst {dimension_numbers = #tpu.dot_dimension_numbers<[1], [0], [0], [1], [0, 0, 1, 1], [], []>} : vector<64x256xf32>, vector<256x128xf32>, vector<64x128xf32> -> vector<64x128xf32>
    %c0_3 = arith.constant 0 : index
    %c0_4 = arith.constant 0 : index
    %3 = vector.load %arg3[%c0_3, %c0_4] : memref<1x128xf32, #tpu.memory_space<vmem>>, vector<1x128xf32>
    %4 = vector.broadcast %3 : vector<1x128xf32> to vector<64x128xf32>
    %5 = arith.addf %2, %4 : vector<64x128xf32>
    %c0_5 = arith.constant 0 : index
    %c0_6 = arith.constant 0 : index
    %6 = vector.load %arg4[%c0_5, %c0_6] : memref<1x128xf32, #tpu.memory_space<vmem>>, vector<1x128xf32>
    %c0_7 = arith.constant 0 : index
    %c0_8 = arith.constant 0 : index
    %7 = vector.load %arg5[%c0_7, %c0_8] : memref<1x128xf32, #tpu.memory_space<vmem>>, vector<1x128xf32>
    %cst_9 = arith.constant dense<0.000000e+00> : vector<64xf32>
    %8 = vector.multi_reduction <add>, %5, %cst_9 [1] : vector<64x128xf32> to vector<64xf32>
    %9 = vector.shape_cast %8 : vector<64xf32> to vector<64x1xf32>
    %cst_10 = arith.constant 1.280000e+02 : f32
    %10 = vector.broadcast %cst_10 : f32 to vector<64x1xf32>
    %11 = arith.divf %9, %10 : vector<64x1xf32>
    %12 = vector.broadcast %11 : vector<64x1xf32> to vector<64x128xf32>
    %13 = arith.subf %5, %12 : vector<64x128xf32>
    %14 = arith.mulf %13, %13 : vector<64x128xf32>
    %cst_11 = arith.constant dense<0.000000e+00> : vector<64xf32>
    %15 = vector.multi_reduction <add>, %14, %cst_11 [1] : vector<64x128xf32> to vector<64xf32>
    %16 = vector.shape_cast %15 : vector<64xf32> to vector<64x1xf32>
    %cst_12 = arith.constant 1.280000e+02 : f32
    %17 = vector.broadcast %cst_12 : f32 to vector<64x1xf32>
    %18 = arith.divf %16, %17 : vector<64x1xf32>
    %19 = vector.broadcast %11 : vector<64x1xf32> to vector<64x128xf32>
    %20 = arith.subf %5, %19 : vector<64x128xf32>
    %cst_13 = arith.constant 9.99999974E-6 : f32
    %21 = vector.broadcast %cst_13 : f32 to vector<64x1xf32>
    %22 = arith.addf %18, %21 : vector<64x1xf32>
    %23 = math.rsqrt %22 : vector<64x1xf32>
    %24 = vector.broadcast %23 : vector<64x1xf32> to vector<64x128xf32>
    %25 = arith.mulf %20, %24 : vector<64x128xf32>
    %26 = vector.broadcast %6 : vector<1x128xf32> to vector<64x128xf32>
    %27 = arith.mulf %25, %26 : vector<64x128xf32>
    %28 = vector.broadcast %7 : vector<1x128xf32> to vector<64x128xf32>
    %29 = arith.addf %27, %28 : vector<64x128xf32>
    %cst_14 = arith.constant 5.000000e-01 : f32
    %30 = vector.broadcast %cst_14 : f32 to vector<64x128xf32>
    %31 = arith.mulf %30, %29 : vector<64x128xf32>
    %cst_15 = arith.constant 0.707106769 : f32
    %32 = vector.broadcast %cst_15 : f32 to vector<64x128xf32>
    %33 = arith.mulf %29, %32 : vector<64x128xf32>
    %34 = math.erf %33 : vector<64x128xf32>
    %cst_16 = arith.constant 1.000000e+00 : f32
    %35 = vector.broadcast %cst_16 : f32 to vector<64x128xf32>
    %36 = arith.addf %35, %34 : vector<64x128xf32>
    %37 = arith.mulf %31, %36 : vector<64x128xf32>
    %38 = vector.shape_cast %37 : vector<64x128xf32> to vector<8x8x128xf32>
    %cst_17 = arith.constant dense<0.000000e+00> : vector<8x128xf32>
    %39 = vector.multi_reduction <add>, %38, %cst_17 [1] : vector<8x8x128xf32> to vector<8x128xf32>
    %cst_18 = arith.constant 8.000000e+00 : f32
    %40 = vector.broadcast %cst_18 : f32 to vector<8x128xf32>
    %41 = arith.divf %39, %40 : vector<8x128xf32>
    %c0_19 = arith.constant 0 : index
    %c0_20 = arith.constant 0 : index
    %42 = vector.load %arg6[%c0_19, %c0_20] : memref<128x128xf32, #tpu.memory_space<vmem>>, vector<128x128xf32>
    %cst_21 = arith.constant dense<0.000000e+00> : vector<8x128xf32>
    %43 = tpu.matmul %41, %42, %cst_21 {dimension_numbers = #tpu.dot_dimension_numbers<[1], [0], [0], [1], [0, 0, 1, 1], [], []>} : vector<8x128xf32>, vector<128x128xf32>, vector<8x128xf32> -> vector<8x128xf32>
    %c0_22 = arith.constant 0 : index
    %c0_23 = arith.constant 0 : index
    %44 = vector.load %arg7[%c0_22, %c0_23] : memref<1x128xf32, #tpu.memory_space<vmem>>, vector<1x128xf32>
    %45 = vector.broadcast %44 : vector<1x128xf32> to vector<8x128xf32>
    %46 = arith.addf %43, %45 : vector<8x128xf32>
    %c0_24 = arith.constant 0 : index
    %c0_25 = arith.constant 0 : index
    %47 = vector.load %arg8[%c0_24, %c0_25] : memref<1x128xf32, #tpu.memory_space<vmem>>, vector<1x128xf32>
    %c0_26 = arith.constant 0 : index
    %c0_27 = arith.constant 0 : index
    %48 = vector.load %arg9[%c0_26, %c0_27] : memref<1x128xf32, #tpu.memory_space<vmem>>, vector<1x128xf32>
    %cst_28 = arith.constant dense<0.000000e+00> : vector<8xf32>
    %49 = vector.multi_reduction <add>, %46, %cst_28 [1] : vector<8x128xf32> to vector<8xf32>
    %50 = vector.shape_cast %49 : vector<8xf32> to vector<8x1xf32>
    %cst_29 = arith.constant 1.280000e+02 : f32
    %51 = vector.broadcast %cst_29 : f32 to vector<8x1xf32>
    %52 = arith.divf %50, %51 : vector<8x1xf32>
    %53 = vector.broadcast %52 : vector<8x1xf32> to vector<8x128xf32>
    %54 = arith.subf %46, %53 : vector<8x128xf32>
    %55 = arith.mulf %54, %54 : vector<8x128xf32>
    %cst_30 = arith.constant dense<0.000000e+00> : vector<8xf32>
    %56 = vector.multi_reduction <add>, %55, %cst_30 [1] : vector<8x128xf32> to vector<8xf32>
    %57 = vector.shape_cast %56 : vector<8xf32> to vector<8x1xf32>
    %cst_31 = arith.constant 1.280000e+02 : f32
    %58 = vector.broadcast %cst_31 : f32 to vector<8x1xf32>
    %59 = arith.divf %57, %58 : vector<8x1xf32>
    %60 = vector.broadcast %52 : vector<8x1xf32> to vector<8x128xf32>
    %61 = arith.subf %46, %60 : vector<8x128xf32>
    %cst_32 = arith.constant 9.99999974E-6 : f32
    %62 = vector.broadcast %cst_32 : f32 to vector<8x1xf32>
    %63 = arith.addf %59, %62 : vector<8x1xf32>
    %64 = math.rsqrt %63 : vector<8x1xf32>
    %65 = vector.broadcast %64 : vector<8x1xf32> to vector<8x128xf32>
    %66 = arith.mulf %61, %65 : vector<8x128xf32>
    %67 = vector.broadcast %47 : vector<1x128xf32> to vector<8x128xf32>
    %68 = arith.mulf %66, %67 : vector<8x128xf32>
    %69 = vector.broadcast %48 : vector<1x128xf32> to vector<8x128xf32>
    %70 = arith.addf %68, %69 : vector<8x128xf32>
    %cst_33 = arith.constant 5.000000e-01 : f32
    %71 = vector.broadcast %cst_33 : f32 to vector<8x128xf32>
    %72 = arith.mulf %71, %70 : vector<8x128xf32>
    %cst_34 = arith.constant 0.707106769 : f32
    %73 = vector.broadcast %cst_34 : f32 to vector<8x128xf32>
    %74 = arith.mulf %70, %73 : vector<8x128xf32>
    %75 = math.erf %74 : vector<8x128xf32>
    %cst_35 = arith.constant 1.000000e+00 : f32
    %76 = vector.broadcast %cst_35 : f32 to vector<8x128xf32>
    %77 = arith.addf %76, %75 : vector<8x128xf32>
    %78 = arith.mulf %72, %77 : vector<8x128xf32>
    %c0_36 = arith.constant 0 : index
    %c0_37 = arith.constant 0 : index
    %79 = vector.load %arg10[%c0_36, %c0_37] : memref<1x128xf32, #tpu.memory_space<vmem>>, vector<1x128xf32>
    %80 = vector.broadcast %79 : vector<1x128xf32> to vector<8x128xf32>
    %81 = arith.mulf %78, %80 : vector<8x128xf32>
    %cst_38 = arith.constant dense<0.000000e+00> : vector<8xf32>
    %82 = vector.multi_reduction <add>, %81, %cst_38 [1] : vector<8x128xf32> to vector<8xf32>
    %c0_39 = arith.constant 0 : index
    %c0_40 = arith.constant 0 : index
    %83 = memref.load %arg11[%c0_39, %c0_40] : memref<1x1xf32, #tpu.memory_space<smem>>
    %84 = vector.broadcast %83 : f32 to vector<8xf32>
    %85 = arith.addf %82, %84 : vector<8xf32>
    %86 = vector.shape_cast %85 : vector<8xf32> to vector<1x1x8xf32>
    %c0_41 = arith.constant 0 : index
    %c0_42 = arith.constant 0 : index
    %c0_43 = arith.constant 0 : index
    %87 = vector.load %arg12[%c0_41, %c0_42, %c0_43] : memref<1x1x8xf32, #tpu.memory_space<vmem>>, vector<1x1x8xf32>
    tpu.vector_store %arg12[%c0_41, %c0_42, %c0_43], %86 {strides = array<i32>} : memref<1x1x8xf32, #tpu.memory_space<vmem>>, vector<1x1x8xf32>,
    return
  }
  func.func @transform_0(%arg0: i32) -> (i32, i32) {
    %c0_i32 = arith.constant 0 : i32
    %c0_i32_0 = arith.constant 0 : i32
    return %arg0, %c0_i32 : i32, i32
  }
  func.func @transform_1(%arg0: i32) -> (i32, i32) {
    %c0_i32 = arith.constant 0 : i32
    %c0_i32_0 = arith.constant 0 : i32
    %c0_i32_1 = arith.constant 0 : i32
    return %c0_i32, %c0_i32_0 : i32, i32
  }
  func.func @transform_2(%arg0: i32) -> (i32, i32) {
    %c0_i32 = arith.constant 0 : i32
    %c0_i32_0 = arith.constant 0 : i32
    %c0_i32_1 = arith.constant 0 : i32
    return %c0_i32, %c0_i32_0 : i32, i32
  }
  func.func @transform_3(%arg0: i32) -> (i32, i32) {
    %c0_i32 = arith.constant 0 : i32
    %c0_i32_0 = arith.constant 0 : i32
    %c0_i32_1 = arith.constant 0 : i32
    return %c0_i32, %c0_i32_0 : i32, i32
  }
  func.func @transform_4(%arg0: i32) -> (i32, i32) {
    %c0_i32 = arith.constant 0 : i32
    %c0_i32_0 = arith.constant 0 : i32
    %c0_i32_1 = arith.constant 0 : i32
    return %c0_i32, %c0_i32_0 : i32, i32
  }
  func.func @transform_5(%arg0: i32) -> (i32, i32) {
    %c0_i32 = arith.constant 0 : i32
    %c0_i32_0 = arith.constant 0 : i32
    %c0_i32_1 = arith.constant 0 : i32
    return %c0_i32, %c0_i32_0 : i32, i32
  }
  func.func @transform_6(%arg0: i32) -> (i32, i32) {
    %c0_i32 = arith.constant 0 : i32
    %c0_i32_0 = arith.constant 0 : i32
    %c0_i32_1 = arith.constant 0 : i32
    return %c0_i32, %c0_i32_0 : i32, i32
  }
  func.func @transform_7(%arg0: i32) -> (i32, i32) {
    %c0_i32 = arith.constant 0 : i32
    %c0_i32_0 = arith.constant 0 : i32
    %c0_i32_1 = arith.constant 0 : i32
    return %c0_i32, %c0_i32_0 : i32, i32
  }
  func.func @transform_8(%arg0: i32) -> (i32, i32) {
    %c0_i32 = arith.constant 0 : i32
    %c0_i32_0 = arith.constant 0 : i32
    %c0_i32_1 = arith.constant 0 : i32
    return %c0_i32, %c0_i32_0 : i32, i32
  }
  func.func @transform_9(%arg0: i32) -> (i32, i32) {
    %c0_i32 = arith.constant 0 : i32
    %c0_i32_0 = arith.constant 0 : i32
    %c0_i32_1 = arith.constant 0 : i32
    return %c0_i32, %c0_i32_0 : i32, i32
  }
  func.func @transform_10(%arg0: i32) -> (i32, i32) {
    %c0_i32 = arith.constant 0 : i32
    %c0_i32_0 = arith.constant 0 : i32
    %c0_i32_1 = arith.constant 0 : i32
    return %c0_i32, %c0_i32_0 : i32, i32
  }
  func.func @transform_11(%arg0: i32) -> (i32, i32, i32) {
    %c0_i32 = arith.constant 0 : i32
    %c0_i32_0 = arith.constant 0 : i32
    %c0_i32_1 = arith.constant 0 : i32
    return %arg0, %c0_i32, %c0_i32_0 : i32, i32, i32
  }
}

module attributes {stable_mosaic.version = 11 : i64} {
  func.func @latent_mlp_kernel(%arg0: i32, %arg1: memref<64x256xf32, #tpu.memory_space<vmem>>, %arg2: memref<256x128xf32, #tpu.memory_space<vmem>>, %arg3: memref<1x128xf32, #tpu.memory_space<vmem>>, %arg4: memref<1x128xf32, #tpu.memory_space<vmem>>, %arg5: memref<1x128xf32, #tpu.memory_space<vmem>>, %arg6: memref<128x128xf32, #tpu.memory_space<vmem>>, %arg7: memref<1x128xf32, #tpu.memory_space<vmem>>, %arg8: memref<1x128xf32, #tpu.memory_space<vmem>>, %arg9: memref<1x128xf32, #tpu.memory_space<vmem>>, %arg10: memref<1x128xf32, #tpu.memory_space<vmem>>, %arg11: memref<1x1xf32, #tpu.memory_space<smem>>, %arg12: memref<1x1x8xf32, #tpu.memory_space<vmem>>) attributes {dimension_semantics = [#tpu.dimension_semantics<parallel>], iteration_bounds = array<i64: 2>, scalar_prefetch = 0 : i64, scratch_operands = 0 : i64, tpu.core_type = #tpu.core_type<tc>, window_params = [{transform_indices = @transform_0, window_bounds = array<i64: 64, 256>}, {pipeline_mode = #tpu.pipeline_mode<synchronous>, transform_indices = @transform_1, window_bounds = array<i64: 256, 128>}, {pipeline_mode = #tpu.pipeline_mode<synchronous>, transform_indices = @transform_2, window_bounds = array<i64: 1, 128>}, {pipeline_mode = #tpu.pipeline_mode<synchronous>, transform_indices = @transform_3, window_bounds = array<i64: 1, 128>}, {pipeline_mode = #tpu.pipeline_mode<synchronous>, transform_indices = @transform_4, window_bounds = array<i64: 1, 128>}, {pipeline_mode = #tpu.pipeline_mode<synchronous>, transform_indices = @transform_5, window_bounds = array<i64: 128, 128>}, {pipeline_mode = #tpu.pipeline_mode<synchronous>, transform_indices = @transform_6, window_bounds = array<i64: 1, 128>}, {pipeline_mode = #tpu.pipeline_mode<synchronous>, transform_indices = @transform_7, window_bounds = array<i64: 1, 128>}, {pipeline_mode = #tpu.pipeline_mode<synchronous>, transform_indices = @transform_8, window_bounds = array<i64: 1, 128>}, {pipeline_mode = #tpu.pipeline_mode<synchronous>, transform_indices = @transform_9, window_bounds = array<i64: 1, 128>}, {transform_indices = @transform_10, window_bounds = array<i64: 1, 1>}, {transform_indices = @transform_11, window_bounds = array<i64: 1, 1, 8>}]} {
    %c0 = arith.constant 0 : index
    %c0_0 = arith.constant 0 : index
    %0 = vector.load %arg1[%c0, %c0_0] : memref<64x256xf32, #tpu.memory_space<vmem>>, vector<64x256xf32>
    %c0_1 = arith.constant 0 : index
    %c0_2 = arith.constant 0 : index
    %1 = vector.load %arg2[%c0_1, %c0_2] : memref<256x128xf32, #tpu.memory_space<vmem>>, vector<256x128xf32>
    %cst = arith.constant dense<0.000000e+00> : vector<64x128xf32>
    %2 = tpu.matmul %0, %1, %cst {dimension_numbers = #tpu.dot_dimension_numbers<[1], [0], [0], [1], [0, 0, 1, 1], [], []>} : vector<64x256xf32>, vector<256x128xf32>, vector<64x128xf32> -> vector<64x128xf32>
    %c0_3 = arith.constant 0 : index
    %c0_4 = arith.constant 0 : index
    %3 = vector.load %arg3[%c0_3, %c0_4] : memref<1x128xf32, #tpu.memory_space<vmem>>, vector<1x128xf32>
    %4 = vector.broadcast %3 : vector<1x128xf32> to vector<64x128xf32>
    %5 = arith.addf %2, %4 : vector<64x128xf32>
    %c0_5 = arith.constant 0 : index
    %c0_6 = arith.constant 0 : index
    %6 = vector.load %arg4[%c0_5, %c0_6] : memref<1x128xf32, #tpu.memory_space<vmem>>, vector<1x128xf32>
    %c0_7 = arith.constant 0 : index
    %c0_8 = arith.constant 0 : index
    %7 = vector.load %arg5[%c0_7, %c0_8] : memref<1x128xf32, #tpu.memory_space<vmem>>, vector<1x128xf32>
    %cst_9 = arith.constant dense<0.000000e+00> : vector<64xf32>
    %8 = vector.multi_reduction <add>, %5, %cst_9 [1] : vector<64x128xf32> to vector<64xf32>
    %9 = vector.shape_cast %8 : vector<64xf32> to vector<64x1xf32>
    %cst_10 = arith.constant 1.280000e+02 : f32
    %10 = vector.broadcast %cst_10 : f32 to vector<64x1xf32>
    %11 = arith.divf %9, %10 : vector<64x1xf32>
    %12 = vector.broadcast %11 : vector<64x1xf32> to vector<64x128xf32>
    %13 = arith.subf %5, %12 : vector<64x128xf32>
    %14 = arith.mulf %13, %13 : vector<64x128xf32>
    %cst_11 = arith.constant dense<0.000000e+00> : vector<64xf32>
    %15 = vector.multi_reduction <add>, %14, %cst_11 [1] : vector<64x128xf32> to vector<64xf32>
    %16 = vector.shape_cast %15 : vector<64xf32> to vector<64x1xf32>
    %cst_12 = arith.constant 1.280000e+02 : f32
    %17 = vector.broadcast %cst_12 : f32 to vector<64x1xf32>
    %18 = arith.divf %16, %17 : vector<64x1xf32>
    %19 = vector.broadcast %11 : vector<64x1xf32> to vector<64x128xf32>
    %20 = arith.subf %5, %19 : vector<64x128xf32>
    %cst_13 = arith.constant 9.99999974E-6 : f32
    %21 = vector.broadcast %cst_13 : f32 to vector<64x1xf32>
    %22 = arith.addf %18, %21 : vector<64x1xf32>
    %23 = math.rsqrt %22 : vector<64x1xf32>
    %24 = vector.broadcast %23 : vector<64x1xf32> to vector<64x128xf32>
    %25 = arith.mulf %20, %24 : vector<64x128xf32>
    %26 = vector.broadcast %6 : vector<1x128xf32> to vector<64x128xf32>
    %27 = arith.mulf %25, %26 : vector<64x128xf32>
    %28 = vector.broadcast %7 : vector<1x128xf32> to vector<64x128xf32>
    %29 = arith.addf %27, %28 : vector<64x128xf32>
    %cst_14 = arith.constant 5.000000e-01 : f32
    %30 = vector.broadcast %cst_14 : f32 to vector<64x128xf32>
    %31 = arith.mulf %30, %29 : vector<64x128xf32>
    %cst_15 = arith.constant 0.707106769 : f32
    %32 = vector.broadcast %cst_15 : f32 to vector<64x128xf32>
    %33 = arith.mulf %29, %32 : vector<64x128xf32>
    %34 = math.erf %33 : vector<64x128xf32>
    %cst_16 = arith.constant 1.000000e+00 : f32
    %35 = vector.broadcast %cst_16 : f32 to vector<64x128xf32>
    %36 = arith.addf %35, %34 : vector<64x128xf32>
    %37 = arith.mulf %31, %36 : vector<64x128xf32>
    %38 = vector.shape_cast %37 : vector<64x128xf32> to vector<8x8x128xf32>
    %cst_17 = arith.constant dense<0.000000e+00> : vector<8x128xf32>
    %39 = vector.multi_reduction <add>, %38, %cst_17 [1] : vector<8x8x128xf32> to vector<8x128xf32>
    %cst_18 = arith.constant 8.000000e+00 : f32
    %40 = vector.broadcast %cst_18 : f32 to vector<8x128xf32>
    %41 = arith.divf %39, %40 : vector<8x128xf32>
    %c0_19 = arith.constant 0 : index
    %c0_20 = arith.constant 0 : index
    %42 = vector.load %arg6[%c0_19, %c0_20] : memref<128x128xf32, #tpu.memory_space<vmem>>, vector<128x128xf32>
    %cst_21 = arith.constant dense<0.000000e+00> : vector<8x128xf32>
    %43 = tpu.matmul %41, %42, %cst_21 {dimension_numbers = #tpu.dot_dimension_numbers<[1], [0], [0], [1], [0, 0, 1, 1], [], []>} : vector<8x128xf32>, vector<128x128xf32>, vector<8x128xf32> -> vector<8x128xf32>
    %c0_22 = arith.constant 0 : index
    %c0_23 = arith.constant 0 : index
    %44 = vector.load %arg7[%c0_22, %c0_23] : memref<1x128xf32, #tpu.memory_space<vmem>>, vector<1x128xf32>
    %45 = vector.broadcast %44 : vector<1x128xf32> to vector<8x128xf32>
    %46 = arith.addf %43, %45 : vector<8x128xf32>
    %c0_24 = arith.constant 0 : index
    %c0_25 = arith.constant 0 : index
    %47 = vector.load %arg8[%c0_24, %c0_25] : memref<1x128xf32, #tpu.memory_space<vmem>>, vector<1x128xf32>
    %c0_26 = arith.constant 0 : index
    %c0_27 = arith.constant 0 : index
    %48 = vector.load %arg9[%c0_26, %c0_27] : memref<1x128xf32, #tpu.memory_space<vmem>>, vector<1x128xf32>
    %cst_28 = arith.constant dense<0.000000e+00> : vector<8xf32>
    %49 = vector.multi_reduction <add>, %46, %cst_28 [1] : vector<8x128xf32> to vector<8xf32>
    %50 = vector.shape_cast %49 : vector<8xf32> to vector<8x1xf32>
    %cst_29 = arith.constant 1.280000e+02 : f32
    %51 = vector.broadcast %cst_29 : f32 to vector<8x1xf32>
    %52 = arith.divf %50, %51 : vector<8x1xf32>
    %53 = vector.broadcast %52 : vector<8x1xf32> to vector<8x128xf32>
    %54 = arith.subf %46, %53 : vector<8x128xf32>
    %55 = arith.mulf %54, %54 : vector<8x128xf32>
    %cst_30 = arith.constant dense<0.000000e+00> : vector<8xf32>
    %56 = vector.multi_reduction <add>, %55, %cst_30 [1] : vector<8x128xf32> to vector<8xf32>
    %57 = vector.shape_cast %56 : vector<8xf32> to vector<8x1xf32>
    %cst_31 = arith.constant 1.280000e+02 : f32
    %58 = vector.broadcast %cst_31 : f32 to vector<8x1xf32>
    %59 = arith.divf %57, %58 : vector<8x1xf32>
    %60 = vector.broadcast %52 : vector<8x1xf32> to vector<8x128xf32>
    %61 = arith.subf %46, %60 : vector<8x128xf32>
    %cst_32 = arith.constant 9.99999974E-6 : f32
    %62 = vector.broadcast %cst_32 : f32 to vector<8x1xf32>
    %63 = arith.addf %59, %62 : vector<8x1xf32>
    %64 = math.rsqrt %63 : vector<8x1xf32>
    %65 = vector.broadcast %64 : vector<8x1xf32> to vector<8x128xf32>
    %66 = arith.mulf %61, %65 : vector<8x128xf32>
    %67 = vector.broadcast %47 : vector<1x128xf32> to vector<8x128xf32>
    %68 = arith.mulf %66, %67 : vector<8x128xf32>
    %69 = vector.broadcast %48 : vector<1x128xf32> to vector<8x128xf32>
    %70 = arith.addf %68, %69 : vector<8x128xf32>
    %cst_33 = arith.constant 5.000000e-01 : f32
    %71 = vector.broadcast %cst_33 : f32 to vector<8x128xf32>
    %72 = arith.mulf %71, %70 : vector<8x128xf32>
    %cst_34 = arith.constant 0.707106769 : f32
    %73 = vector.broadcast %cst_34 : f32 to vector<8x128xf32>
    %74 = arith.mulf %70, %73 : vector<8x128xf32>
    %75 = math.erf %74 : vector<8x128xf32>
    %cst_35 = arith.constant 1.000000e+00 : f32
    %76 = vector.broadcast %cst_35 : f32 to vector<8x128xf32>
    %77 = arith.addf %76, %75 : vector<8x128xf32>
    %78 = arith.mulf %72, %77 : vector<8x128xf32>
    %c0_36 = arith.constant 0 : index
    %c0_37 = arith.constant 0 : index
    %79 = vector.load %arg10[%c0_36, %c0_37] : memref<1x128xf32, #tpu.memory_space<vmem>>, vector<1x128xf32>
    %80 = vector.broadcast %79 : vector<1x128xf32> to vector<8x128xf32>
    %81 = arith.mulf %78, %80 : vector<8x128xf32>
    %cst_38 = arith.constant dense<0.000000e+00> : vector<8xf32>
    %82 = vector.multi_reduction <add>, %81, %cst_38 [1] : vector<8x128xf32> to vector<8xf32>
    %c0_39 = arith.constant 0 : index
    %c0_40 = arith.constant 0 : index
    %83 = memref.load %arg11[%c0_39, %c0_40] : memref<1x1xf32, #tpu.memory_space<smem>>
    %84 = vector.broadcast %83 : f32 to vector<8xf32>
    %85 = arith.addf %82, %84 : vector<8xf32>
    %86 = vector.shape_cast %85 : vector<8xf32> to vector<1x1x8xf32>
    %c0_41 = arith.constant 0 : index
    %c0_42 = arith.constant 0 : index
    %c0_43 = arith.constant 0 : index
    %87 = vector.load %arg12[%c0_41, %c0_42, %c0_43] : memref<1x1x8xf32, #tpu.memory_space<vmem>>, vector<1x1x8xf32>
    tpu.vector_store %arg12[%c0_41, %c0_42, %c0_43], %86 {strides = array<i32>} : memref<1x1x8xf32, #tpu.memory_space<vmem>>, vector<1x1x8xf32>,
    return
  }
  func.func @transform_0(%arg0: i32) -> (i32, i32) {
    %c0_i32 = arith.constant 0 : i32
    %c0_i32_0 = arith.constant 0 : i32
    return %arg0, %c0_i32 : i32, i32
  }
  func.func @transform_1(%arg0: i32) -> (i32, i32) {
    %c0_i32 = arith.constant 0 : i32
    %c0_i32_0 = arith.constant 0 : i32
    %c0_i32_1 = arith.constant 0 : i32
    return %c0_i32, %c0_i32_0 : i32, i32
  }
  func.func @transform_2(%arg0: i32) -> (i32, i32) {
    %c0_i32 = arith.constant 0 : i32
    %c0_i32_0 = arith.constant 0 : i32
    %c0_i32_1 = arith.constant 0 : i32
    return %c0_i32, %c0_i32_0 : i32, i32
  }
  func.func @transform_3(%arg0: i32) -> (i32, i32) {
    %c0_i32 = arith.constant 0 : i32
    %c0_i32_0 = arith.constant 0 : i32
    %c0_i32_1 = arith.constant 0 : i32
    return %c0_i32, %c0_i32_0 : i32, i32
  }
  func.func @transform_4(%arg0: i32) -> (i32, i32) {
    %c0_i32 = arith.constant 0 : i32
    %c0_i32_0 = arith.constant 0 : i32
    %c0_i32_1 = arith.constant 0 : i32
    return %c0_i32, %c0_i32_0 : i32, i32
  }
  func.func @transform_5(%arg0: i32) -> (i32, i32) {
    %c0_i32 = arith.constant 0 : i32
    %c0_i32_0 = arith.constant 0 : i32
    %c0_i32_1 = arith.constant 0 : i32
    return %c0_i32, %c0_i32_0 : i32, i32
  }
  func.func @transform_6(%arg0: i32) -> (i32, i32) {
    %c0_i32 = arith.constant 0 : i32
    %c0_i32_0 = arith.constant 0 : i32
    %c0_i32_1 = arith.constant 0 : i32
    return %c0_i32, %c0_i32_0 : i32, i32
  }
  func.func @transform_7(%arg0: i32) -> (i32, i32) {
    %c0_i32 = arith.constant 0 : i32
    %c0_i32_0 = arith.constant 0 : i32
    %c0_i32_1 = arith.constant 0 : i32
    return %c0_i32, %c0_i32_0 : i32, i32
  }
  func.func @transform_8(%arg0: i32) -> (i32, i32) {
    %c0_i32 = arith.constant 0 : i32
    %c0_i32_0 = arith.constant 0 : i32
    %c0_i32_1 = arith.constant 0 : i32
    return %c0_i32, %c0_i32_0 : i32, i32
  }
  func.func @transform_9(%arg0: i32) -> (i32, i32) {
    %c0_i32 = arith.constant 0 : i32
    %c0_i32_0 = arith.constant 0 : i32
    %c0_i32_1 = arith.constant 0 : i32
    return %c0_i32, %c0_i32_0 : i32, i32
  }
  func.func @transform_10(%arg0: i32) -> (i32, i32) {
    %c0_i32 = arith.constant 0 : i32
    %c0_i32_0 = arith.constant 0 : i32
    %c0_i32_1 = arith.constant 0 : i32
    return %c0_i32, %c0_i32_0 : i32, i32
  }
  func.func @transform_11(%arg0: i32) -> (i32, i32, i32) {
    %c0_i32 = arith.constant 0 : i32
    %c0_i32_0 = arith.constant 0 : i32
    %c0_i32_1 = arith.constant 0 : i32
    return %arg0, %c0_i32, %c0_i32_0 : i32, i32, i32
  }
}

</mosaic_0001>

<llo_original>
// kernel: tpu_custom_call.1
$region0: #{tpu_custom_call.1}
  #allocation0 [shape = 'u32[]', space=smem, size = 0x4, offset = 0x4, fixed_abs, tag = 'smem constant byte address 0x4 - core index']
  #allocation1 [shape = 'u32[144,128]{1,0:T(1,128)}', space=vmem, size = 0x12000, scoped, tag = 'internal scratch']
  #allocation2 [shape = 'f32[1,1]{1,0:T(1,128)S(6)}', space=smem, size = 0x200, scoped, tag = 'scoped memory for tpu_custom_call.1']
  %s0 = inlined_call_operand.hbm [shape: f32[128,256], index: 0, kind: input, shape index: {}]
  %s1 = inlined_call_operand.hbm [shape: f32[256,128], index: 1, kind: input, shape index: {}]
  %s2 = inlined_call_operand.vmem [shape: f32[1,128], index: 2, kind: input, shape index: {}]
  %s3 = inlined_call_operand.vmem [shape: f32[1,128], index: 3, kind: input, shape index: {}]
  %s4 = inlined_call_operand.vmem [shape: f32[1,128], index: 4, kind: input, shape index: {}]
  %s5 = inlined_call_operand.hbm [shape: f32[128,128], index: 5, kind: input, shape index: {}]
  %s6 = inlined_call_operand.vmem [shape: f32[1,128], index: 6, kind: input, shape index: {}]
  %s7 = inlined_call_operand.vmem [shape: f32[1,128], index: 7, kind: input, shape index: {}]
  %s8 = inlined_call_operand.vmem [shape: f32[1,128], index: 8, kind: input, shape index: {}]
  %s9 = inlined_call_operand.vmem [shape: f32[1,128], index: 9, kind: input, shape index: {}]
  %s10 = inlined_call_operand.<no memory space> [shape: f32[1,1], index: 10, kind: input, shape index: {}]
  %s11 = inlined_call_operand.hbm [shape: f32[2,1,8], index: 11, kind: output, shape index: {}]
  %s12 = sld [smem:[#allocation0]]
  $region89: #{tpu_custom_call.1} parent=0
    _
  %s14 = ssub.s32 1, %s12
  %s15 = scalar_select 0, %s14, %s12
  %16 = sst [smem:[#allocation2]] %s10
  $region1: #{tpu_custom_call.1} parent=0
    #allocation3 [shape = 'u8[131072]{0}', space=vmem, size = 0x20000, scoped, tag = 'input window, operand 0']
    #allocation4 [shape = 's32[2]{0}', space=sflag, size = 0x8, scoped, tag = 'scoped memory for tpu_custom_call.1']
    #allocation5 [shape = 's32[2]{0}', space=sflag, size = 0x8, scoped, tag = 'scoped memory for tpu_custom_call.1']
    #allocation6 [shape = 'u8[131072]{0}', space=vmem, size = 0x20000, scoped, tag = 'input window, operand 1, single buffered']
    #allocation7 [shape = 's32[1]{0}', space=sflag, size = 0x4, scoped, tag = 'scoped memory for tpu_custom_call.1']
    #allocation8 [shape = 'u8[65536]{0}', space=vmem, size = 0x10000, scoped, tag = 'input window, operand 5, single buffered']
    #allocation9 [shape = 'u8[1024]{0}', space=vmem, size = 0x400, scoped, tag = 'output window, operand 0']
    %17 = vsyncpa [#allocation4], 0
    %s18 = scalar_lea.sflag [#allocation4], 1
    %19 = vsyncpa %s18, 0
    %20 = vsyncpa [#allocation7], 0
    %21 = vsyncpa [#allocation5], 0
    %s22 = scalar_lea.sflag [#allocation5], 1
    %23 = vsyncpa %s22, 0
    loop: start=0, step=1, limit=4
    $region2: #{tpu_custom_call.1} parent=1 // loop_pre_header
      _
    $region3: #{tpu_custom_call.1} parent=1 // loop_header
      %s25 = sphi 0, %s29
      %p26 = scmp.ge.s32.totalorder %s25, 4
      %s35 = sphi 0, %s37
      %s38 = sphi 0, %s35
      %s39 = sphi 0, %s38
      %s55 = sphi 0, %s39
      %s59 = sphi 0, %s59
      %s61 = sphi 0, %s59
      %s62 = sphi 0, %s61
      %s76 = sphi 0, %s62
      %s80 = sphi 0, %s80
      %s82 = sphi 0, %s80
      %s83 = sphi 0, %s82
      %s97 = sphi 0, %s83
      %s101 = sphi 0, %s101
      %s103 = sphi 0, %s101
      %s104 = sphi 0, %s103
      %s118 = sphi 0, %s104
      %s122 = sphi 0, %s122
      %s124 = sphi 0, %s122
      %s125 = sphi 0, %s124
      %s139 = sphi 0, %s125
      %s143 = sphi 0, %s143
      %s145 = sphi 0, %s143
      %s146 = sphi 0, %s145
      %s160 = sphi 0, %s146
      %s164 = sphi 0, %s164
      %s166 = sphi 0, %s164
      %s167 = sphi 0, %s166
      %s181 = sphi 0, %s167
      %s185 = sphi 0, %s185
      %s187 = sphi 0, %s185
      %s188 = sphi 0, %s187
      %s202 = sphi 0, %s188
      %s206 = sphi 0, %s206
      %s208 = sphi 0, %s206
      %s209 = sphi 0, %s208
      %s223 = sphi 0, %s209
      %s227 = sphi 0, %s227
      %s229 = sphi 0, %s227
      %s230 = sphi 0, %s229
      %s244 = sphi 0, %s230
      %s248 = sphi 0, %s248
      %s250 = sphi 0, %s248
      %s251 = sphi 0, %s250
      %s265 = sphi 0, %s251
      %s271 = sphi 0, %s273
      %s274 = sphi 0, %s271
      %s275 = sphi 0, %s274
      %s291 = sphi 0, %s275
    $region4: #{tpu_custom_call.1} parent=1 // loop_header_branch
      %28 = sbr.rel (%p26) target = $region8
    $region5: #{tpu_custom_call.1} parent=1 // loop_body
      %s30 = ssub.s32 %s25, 1
      %s31 = ssub.s32 %s25, 2
      %s32 = sadd.s32 %s25, 1
      %s33 = ssub.s32 %s25, %s32
      %p34 = scmp.eq.s32.totalorder %s33, 0
      %s36 = sadd.s32 %s35, 1
      %s37 = scalar_select %p34, %s35, %s36
      %p40 = pneg %p34
      %p41 = scmp.eq.s32.totalorder %s25, 1
      %p42 = por %p40, %p41
      %p43 = scmp.ne.s32.totalorder %s35, %s38
      %p44 = scmp.eq.s32.totalorder %s25, 0
      %p45 = por %p43, %p44
      %p46 = scmp.ne.s32.totalorder %s35, %s38
      %p47 = scmp.eq.s32.totalorder %s30, 1
      %p48 = por %p46, %p47
      %p49 = scmp.ne.s32.totalorder %s38, %s39
      %p50 = scmp.eq.s32.totalorder %s30, 0
      %p51 = por %p49, %p50
      %p52 = scmp.ne.s32.totalorder %s38, %s39
      %p53 = scmp.eq.s32.totalorder %s31, 1
      %p54 = por %p52, %p53
      %p56 = scmp.ne.s32.totalorder %s39, %s55
      %p57 = scmp.eq.s32.totalorder %s31, 0
      %p58 = por %p56, %p57
      %s60 = sadd.s32 %s59, 1
      %p63 = scmp.eq.s32.totalorder %s25, 1
      %p64 = scmp.ne.s32.totalorder %s59, %s61
      %p65 = scmp.eq.s32.totalorder %s25, 0
      %p66 = por %p64, %p65
      %p67 = scmp.ne.s32.totalorder %s59, %s61
      %p68 = scmp.eq.s32.totalorder %s30, 1
      %p69 = por %p67, %p68
      %p70 = scmp.ne.s32.totalorder %s61, %s62
      %p71 = scmp.eq.s32.totalorder %s30, 0
      %p72 = por %p70, %p71
      %p73 = scmp.ne.s32.totalorder %s61, %s62
      %p74 = scmp.eq.s32.totalorder %s31, 1
      %p75 = por %p73, %p74
      %p77 = scmp.ne.s32.totalorder %s62, %s76
      %p78 = scmp.eq.s32.totalorder %s31, 0
      %p79 = por %p77, %p78
      %s81 = sadd.s32 %s80, 1
      %p84 = scmp.eq.s32.totalorder %s25, 1
      %p85 = scmp.ne.s32.totalorder %s80, %s82
      %p86 = scmp.eq.s32.totalorder %s25, 0
      %p87 = por %p85, %p86
      %p88 = scmp.ne.s32.totalorder %s80, %s82
      %p89 = scmp.eq.s32.totalorder %s30, 1
      %p90 = por %p88, %p89
      %p91 = scmp.ne.s32.totalorder %s82, %s83
      %p92 = scmp.eq.s32.totalorder %s30, 0
      %p93 = por %p91, %p92
      %p94 = scmp.ne.s32.totalorder %s82, %s83
      %p95 = scmp.eq.s32.totalorder %s31, 1
      %p96 = por %p94, %p95
      %p98 = scmp.ne.s32.totalorder %s83, %s97
      %p99 = scmp.eq.s32.totalorder %s31, 0
      %p100 = por %p98, %p99
      %s102 = sadd.s32 %s101, 1
      %p105 = scmp.eq.s32.totalorder %s25, 1
      %p106 = scmp.ne.s32.totalorder %s101, %s103
      %p107 = scmp.eq.s32.totalorder %s25, 0
      %p108 = por %p106, %p107
      %p109 = scmp.ne.s32.totalorder %s101, %s103
      %p110 = scmp.eq.s32.totalorder %s30, 1
      %p111 = por %p109, %p110
      %p112 = scmp.ne.s32.totalorder %s103, %s104
      %p113 = scmp.eq.s32.totalorder %s30, 0
      %p114 = por %p112, %p113
      %p115 = scmp.ne.s32.totalorder %s103, %s104
      %p116 = scmp.eq.s32.totalorder %s31, 1
      %p117 = por %p115, %p116
      %p119 = scmp.ne.s32.totalorder %s104, %s118
      %p120 = scmp.eq.s32.totalorder %s31, 0
      %p121 = por %p119, %p120
      %s123 = sadd.s32 %s122, 1
      %p126 = scmp.eq.s32.totalorder %s25, 1
      %p127 = scmp.ne.s32.totalorder %s122, %s124
      %p128 = scmp.eq.s32.totalorder %s25, 0
      %p129 = por %p127, %p128
      %p130 = scmp.ne.s32.totalorder %s122, %s124
      %p131 = scmp.eq.s32.totalorder %s30, 1
      %p132 = por %p130, %p131
      %p133 = scmp.ne.s32.totalorder %s124, %s125
      %p134 = scmp.eq.s32.totalorder %s30, 0
      %p135 = por %p133, %p134
      %p136 = scmp.ne.s32.totalorder %s124, %s125
      %p137 = scmp.eq.s32.totalorder %s31, 1
      %p138 = por %p136, %p137
      %p140 = scmp.ne.s32.totalorder %s125, %s139
      %p141 = scmp.eq.s32.totalorder %s31, 0
      %p142 = por %p140, %p141
      %s144 = sadd.s32 %s143, 1
      %p147 = scmp.eq.s32.totalorder %s25, 1
      %p148 = scmp.ne.s32.totalorder %s143, %s145
      %p149 = scmp.eq.s32.totalorder %s25, 0
      %p150 = por %p148, %p149
      %p151 = scmp.ne.s32.totalorder %s143, %s145
      %p152 = scmp.eq.s32.totalorder %s30, 1
      %p153 = por %p151, %p152
      %p154 = scmp.ne.s32.totalorder %s145, %s146
      %p155 = scmp.eq.s32.totalorder %s30, 0
      %p156 = por %p154, %p155
      %p157 = scmp.ne.s32.totalorder %s145, %s146
      %p158 = scmp.eq.s32.totalorder %s31, 1
      %p159 = por %p157, %p158
      %p161 = scmp.ne.s32.totalorder %s146, %s160
      %p162 = scmp.eq.s32.totalorder %s31, 0
      %p163 = por %p161, %p162
      %s165 = sadd.s32 %s164, 1
      %p168 = scmp.eq.s32.totalorder %s25, 1
      %p169 = scmp.ne.s32.totalorder %s164, %s166
      %p170 = scmp.eq.s32.totalorder %s25, 0
      %p171 = por %p169, %p170
      %p172 = scmp.ne.s32.totalorder %s164, %s166
      %p173 = scmp.eq.s32.totalorder %s30, 1
      %p174 = por %p172, %p173
      %p175 = scmp.ne.s32.totalorder %s166, %s167
      %p176 = scmp.eq.s32.totalorder %s30, 0
      %p177 = por %p175, %p176
      %p178 = scmp.ne.s32.totalorder %s166, %s167
      %p179 = scmp.eq.s32.totalorder %s31, 1
      %p180 = por %p178, %p179
      %p182 = scmp.ne.s32.totalorder %s167, %s181
      %p183 = scmp.eq.s32.totalorder %s31, 0
      %p184 = por %p182, %p183
      %s186 = sadd.s32 %s185, 1
      %p189 = scmp.eq.s32.totalorder %s25, 1
      %p190 = scmp.ne.s32.totalorder %s185, %s187
      %p191 = scmp.eq.s32.totalorder %s25, 0
      %p192 = por %p190, %p191
      %p193 = scmp.ne.s32.totalorder %s185, %s187
      %p194 = scmp.eq.s32.totalorder %s30, 1
      %p195 = por %p193, %p194
      %p196 = scmp.ne.s32.totalorder %s187, %s188
      %p197 = scmp.eq.s32.totalorder %s30, 0
      %p198 = por %p196, %p197
      %p199 = scmp.ne.s32.totalorder %s187, %s188
      %p200 = scmp.eq.s32.totalorder %s31, 1
      %p201 = por %p199, %p200
      %p203 = scmp.ne.s32.totalorder %s188, %s202
      %p204 = scmp.eq.s32.totalorder %s31, 0
      %p205 = por %p203, %p204
      %s207 = sadd.s32 %s206, 1
      %p210 = scmp.eq.s32.totalorder %s25, 1
      %p211 = scmp.ne.s32.totalorder %s206, %s208
      %p212 = scmp.eq.s32.totalorder %s25, 0
      %p213 = por %p211, %p212
      %p214 = scmp.ne.s32.totalorder %s206, %s208
      %p215 = scmp.eq.s32.totalorder %s30, 1
      %p216 = por %p214, %p215
      %p217 = scmp.ne.s32.totalorder %s208, %s209
      %p218 = scmp.eq.s32.totalorder %s30, 0
      %p219 = por %p217, %p218
      %p220 = scmp.ne.s32.totalorder %s208, %s209
      %p221 = scmp.eq.s32.totalorder %s31, 1
      %p222 = por %p220, %p221
      %p224 = scmp.ne.s32.totalorder %s209, %s223
      %p225 = scmp.eq.s32.totalorder %s31, 0
      %p226 = por %p224, %p225
      %s228 = sadd.s32 %s227, 1
      %p231 = scmp.eq.s32.totalorder %s25, 1
      %p232 = scmp.ne.s32.totalorder %s227, %s229
      %p233 = scmp.eq.s32.totalorder %s25, 0
      %p234 = por %p232, %p233
      %p235 = scmp.ne.s32.totalorder %s227, %s229
      %p236 = scmp.eq.s32.totalorder %s30, 1
      %p237 = por %p235, %p236
      %p238 = scmp.ne.s32.totalorder %s229, %s230
      %p239 = scmp.eq.s32.totalorder %s30, 0
      %p240 = por %p238, %p239
      %p241 = scmp.ne.s32.totalorder %s229, %s230
      %p242 = scmp.eq.s32.totalorder %s31, 1
      %p243 = por %p241, %p242
      %p245 = scmp.ne.s32.totalorder %s230, %s244
      %p246 = scmp.eq.s32.totalorder %s31, 0
      %p247 = por %p245, %p246
      %s249 = sadd.s32 %s248, 1
      %p252 = scmp.eq.s32.totalorder %s25, 1
      %p253 = scmp.ne.s32.totalorder %s248, %s250
      %p254 = scmp.eq.s32.totalorder %s25, 0
      %p255 = por %p253, %p254
      %p256 = scmp.ne.s32.totalorder %s248, %s250
      %p257 = scmp.eq.s32.totalorder %s30, 1
      %p258 = por %p256, %p257
      %p259 = scmp.ne.s32.totalorder %s250, %s251
      %p260 = scmp.eq.s32.totalorder %s30, 0
      %p261 = por %p259, %p260
      %p262 = scmp.ne.s32.totalorder %s250, %s251
      %p263 = scmp.eq.s32.totalorder %s31, 1
      %p264 = por %p262, %p263
      %p266 = scmp.ne.s32.totalorder %s251, %s265
      %p267 = scmp.eq.s32.totalorder %s31, 0
      %p268 = por %p266, %p267
      %s269 = ssub.s32 %s25, %s32
      %p270 = scmp.eq.s32.totalorder %s269, 0
      %s272 = sadd.s32 %s271, 1
      %s273 = scalar_select %p270, %s271, %s272
      %p276 = pneg %p270
      %p277 = scmp.eq.s32.totalorder %s25, 1
      %p278 = por %p276, %p277
      %p279 = scmp.ne.s32.totalorder %s271, %s274
      %p280 = scmp.eq.s32.totalorder %s25, 0
      %p281 = por %p279, %p280
      %p282 = scmp.ne.s32.totalorder %s271, %s274
      %p283 = scmp.eq.s32.totalorder %s30, 1
      %p284 = por %p282, %p283
      %p285 = scmp.ne.s32.totalorder %s274, %s275
      %p286 = scmp.eq.s32.totalorder %s30, 0
      %p287 = por %p285, %p286
      %p288 = scmp.ne.s32.totalorder %s274, %s275
      %p289 = scmp.eq.s32.totalorder %s31, 1
      %p290 = por %p288, %p289
      %p292 = scmp.ne.s32.totalorder %s275, %s291
      %p293 = scmp.eq.s32.totalorder %s31, 0
      %p294 = por %p292, %p293
      %p295 = scmp.le.s32.totalorder 1, %s25
      %p296 = scmp.lt.s32.totalorder %s25, 3
      %p297 = pnand %p295, %p296
      %p298 = pneg %p297
      // Predicated region
      $region9: #{tpu_custom_call.1} parent=5 // pred_check
        _
      $region10: #{tpu_custom_call.1} parent=5 // pred_check_branch
        %300 = sbr.rel (%p297) target = $region12
      $region11: #{tpu_custom_call.1} parent=5 // pred_region
        %s301 = ssub.s32 %s25, 1
        // Predicated region
        $region13: #{tpu_custom_call.1} parent=11 // pred_check
          %p302 = pneg %p72
        $region14: #{tpu_custom_call.1} parent=11 // pred_check_branch
          %304 = sbr.rel (%p302) target = $region16
        $region15: #{tpu_custom_call.1} parent=11 // pred_region
          %s306 = ssub.s32 4096, 4096
          %307 = vsyncadd [#allocation7], %s306
          %s308 = sshll.u32 [#allocation6], 4
          %s309 = int_to_ptr.vmem [resolvable:$true] %s308
          %314 = dma.hbm_to_vmem [thread:$0]  %s1, 4096, %s309, [#allocation7], 128, 128, 8
        $region16: #{tpu_custom_call.1} parent=11 // pred_fallthru
          _
        // Predicated region
        $region17: #{tpu_custom_call.1} parent=11 // pred_check
          %p315 = pneg %p93
        $region18: #{tpu_custom_call.1} parent=11 // pred_check_branch
          %317 = sbr.rel (%p315) target = $region20
        $region19: #{tpu_custom_call.1} parent=11 // pred_region
          _
        $region20: #{tpu_custom_call.1} parent=11 // pred_fallthru
          _
        // Predicated region
        $region21: #{tpu_custom_call.1} parent=11 // pred_check
          %p318 = pneg %p114
        $region22: #{tpu_custom_call.1} parent=11 // pred_check_branch
          %320 = sbr.rel (%p318) target = $region24
        $region23: #{tpu_custom_call.1} parent=11 // pred_region
          _
        $region24: #{tpu_custom_call.1} parent=11 // pred_fallthru
          _
        // Predicated region
        $region25: #{tpu_custom_call.1} parent=11 // pred_check
          %p321 = pneg %p135
        $region26: #{tpu_custom_call.1} parent=11 // pred_check_branch
          %323 = sbr.rel (%p321) target = $region28
        $region27: #{tpu_custom_call.1} parent=11 // pred_region
          _
        $region28: #{tpu_custom_call.1} parent=11 // pred_fallthru
          _
        // Predicated region
        $region29: #{tpu_custom_call.1} parent=11 // pred_check
          %p324 = pneg %p156
        $region30: #{tpu_custom_call.1} parent=11 // pred_check_branch
          %326 = sbr.rel (%p324) target = $region32
        $region31: #{tpu_custom_call.1} parent=11 // pred_region
          %s328 = ssub.s32 2048, 2048
          %329 = vsyncadd [#allocation7], %s328
          %s330 = sshll.u32 [#allocation8], 4
          %s331 = int_to_ptr.vmem [resolvable:$true] %s330
          %336 = dma.hbm_to_vmem [thread:$0]  %s5, 2048, %s331, [#allocation7], 128, 128, 8
        $region32: #{tpu_custom_call.1} parent=11 // pred_fallthru
          _
        // Predicated region
        $region33: #{tpu_custom_call.1} parent=11 // pred_check
          %p337 = pneg %p177
        $region34: #{tpu_custom_call.1} parent=11 // pred_check_branch
          %339 = sbr.rel (%p337) target = $region36
        $region35: #{tpu_custom_call.1} parent=11 // pred_region
          _
        $region36: #{tpu_custom_call.1} parent=11 // pred_fallthru
          _
        // Predicated region
        $region37: #{tpu_custom_call.1} parent=11 // pred_check
          %p340 = pneg %p198
        $region38: #{tpu_custom_call.1} parent=11 // pred_check_branch
          %342 = sbr.rel (%p340) target = $region40
        $region39: #{tpu_custom_call.1} parent=11 // pred_region
          _
        $region40: #{tpu_custom_call.1} parent=11 // pred_fallthru
          _
        // Predicated region
        $region41: #{tpu_custom_call.1} parent=11 // pred_check
          %p343 = pneg %p219
        $region42: #{tpu_custom_call.1} parent=11 // pred_check_branch
          %345 = sbr.rel (%p343) target = $region44
        $region43: #{tpu_custom_call.1} parent=11 // pred_region
          _
        $region44: #{tpu_custom_call.1} parent=11 // pred_fallthru
          _
        // Predicated region
        $region45: #{tpu_custom_call.1} parent=11 // pred_check
          %p346 = pneg %p240
        $region46: #{tpu_custom_call.1} parent=11 // pred_check_branch
          %348 = sbr.rel (%p346) target = $region48
        $region47: #{tpu_custom_call.1} parent=11 // pred_region
          _
        $region48: #{tpu_custom_call.1} parent=11 // pred_fallthru
          _
        // Predicated region
        $region49: #{tpu_custom_call.1} parent=11 // pred_check
          %p349 = pneg %p261
        $region50: #{tpu_custom_call.1} parent=11 // pred_check_branch
          %351 = sbr.rel (%p349) target = $region52
        $region51: #{tpu_custom_call.1} parent=11 // pred_region
          _
        $region52: #{tpu_custom_call.1} parent=11 // pred_fallthru
          _
      $region12: #{tpu_custom_call.1} parent=5 // pred_fallthru
        _
      %p352 = scmp.lt.s32.totalorder %s25, 2
      // Predicated region
      $region53: #{tpu_custom_call.1} parent=5 // pred_check
        %p353 = pneg %p352
      $region54: #{tpu_custom_call.1} parent=5 // pred_check_branch
        %355 = sbr.rel (%p353) target = $region56
      $region55: #{tpu_custom_call.1} parent=5 // pred_region
        // Predicated region
        $region57: #{tpu_custom_call.1} parent=55 // pred_check
          %p356 = pneg %p45
        $region58: #{tpu_custom_call.1} parent=55 // pred_check_branch
          %358 = sbr.rel (%p356) target = $region60
        $region59: #{tpu_custom_call.1} parent=55 // pred_region
          %s359 = sand.u32 %s35, 1
          %s360 = scalar_lea.sflag [#allocation4], %s359
          %s361 = sand.u32 %s35, 1
          %s362 = smul.addr %s361, 128
          %s363 = scalar_lea.vmem [#allocation3], %s362
          %s364 = smul.u32 8, %s25
          %s366 = ssub.s32 2048, 2048
          %367 = vsyncadd %s360, %s366
          %s368 = smul.addr %s364, 2
          %s369 = smul.addr %s368, 128
          %s370 = scalar_lea.hbm %s0, %s369
          %s371 = sshll.u32 %s363, 4
          %s372 = int_to_ptr.vmem [resolvable:$true] %s371
          %377 = dma.hbm_to_vmem [thread:$0]  %s370, 2048, %s372, %s360, 256, 256, 16
        $region60: #{tpu_custom_call.1} parent=55 // pred_fallthru
          _
      $region56: #{tpu_custom_call.1} parent=5 // pred_fallthru
        _
      %p378 = scmp.le.s32.totalorder 1, %s25
      %p379 = scmp.lt.s32.totalorder %s25, 3
      %p380 = pnand %p378, %p379
      %p381 = pneg %p380
      // Predicated region
      $region61: #{tpu_custom_call.1} parent=5 // pred_check
        _
      $region62: #{tpu_custom_call.1} parent=5 // pred_check_branch
        %383 = sbr.rel (%p380) target = $region64
      $region63: #{tpu_custom_call.1} parent=5 // pred_region
        %s384 = ssub.s32 %s25, 1
        %s385 = sand.u32 %s38, 1
        %s386 = scalar_lea.sflag [#allocation4], %s385
        %s387 = sand.u32 %s38, 1
        %s388 = smul.addr %s387, 128
        %s389 = scalar_lea.vmem [#allocation3], %s388
        // Predicated region
        $region65: #{tpu_custom_call.1} parent=63 // pred_check
          %p390 = pneg %p51
        $region66: #{tpu_custom_call.1} parent=63 // pred_check_branch
          %392 = sbr.rel (%p390) target = $region68
        $region67: #{tpu_custom_call.1} parent=63 // pred_region
          %393 = dma.done %s386, 2048
        $region68: #{tpu_custom_call.1} parent=63 // pred_fallthru
          _
        // Predicated region
        $region69: #{tpu_custom_call.1} parent=63 // pred_check
          %p394 = pneg %p72
        $region70: #{tpu_custom_call.1} parent=63 // pred_check_branch
          %396 = sbr.rel (%p394) target = $region72
        $region71: #{tpu_custom_call.1} parent=63 // pred_region
          %397 = dma.done [#allocation7], 4096
        $region72: #{tpu_custom_call.1} parent=63 // pred_fallthru
          _
        // Predicated region
        $region73: #{tpu_custom_call.1} parent=63 // pred_check
          %p398 = pneg %p156
        $region74: #{tpu_custom_call.1} parent=63 // pred_check_branch
          %400 = sbr.rel (%p398) target = $region76
        $region75: #{tpu_custom_call.1} parent=63 // pred_region
          %401 = dma.done [#allocation7], 2048
        $region76: #{tpu_custom_call.1} parent=63 // pred_fallthru
          _
        %s402 = sand.u32 %s38, 1
        %s403 = scalar_lea.sflag [#allocation4], %s402
        %s404 = sand.u32 %s38, 1
        %s405 = smul.addr %s404, 128
        %s406 = scalar_lea.vmem [#allocation3], %s405
        %p407 = pneg %p51
        %p408 = pneg %p48
        %p409 = pneg %p72
        %p410 = pneg %p69
        %p411 = pneg %p93
        %p412 = pneg %p90
        %p413 = pneg %p114
        %p414 = pneg %p111
        %p415 = pneg %p135
        %p416 = pneg %p132
        %p417 = pneg %p156
        %p418 = pneg %p153
        %p419 = pneg %p177
        %p420 = pneg %p174
        %p421 = pneg %p198
        %p422 = pneg %p195
        %p423 = pneg %p219
        %p424 = pneg %p216
        %p425 = pneg %p240
        %p426 = pneg %p237
        %p427 = pneg %p261
        %p428 = pneg %p258
        %p429 = pneg %p287
        %p430 = pneg %p284
        %s431 = sand.u32 %s274, 1
        %s432 = scalar_lea.sflag [#allocation5], %s431
        %s433 = sand.u32 %s274, 1
        %s434 = scalar_lea.vmem [#allocation9], %s433
        %s435 = smul.u32 8, %s30
        %v436 = vld [vmem:[%s389] sm:$0xff]
        %v437 = vld [vmem:[%s389 + $0x8] sm:$0xff]
        %v438 = vld [vmem:[%s389 + $0x10] sm:$0xff]
        %v439 = vld [vmem:[%s389 + $0x18] sm:$0xff]
        %v440 = vld [vmem:[%s389 + $0x20] sm:$0xff]
        %v441 = vld [vmem:[%s389 + $0x28] sm:$0xff]
        %v442 = vld [vmem:[%s389 + $0x30] sm:$0xff]
        %v443 = vld [vmem:[%s389 + $0x38] sm:$0xff]
        %v444 = vld [vmem:[%s389 + $0x40] sm:$0xff]
        %v445 = vld [vmem:[%s389 + $0x48] sm:$0xff]
        %v446 = vld [vmem:[%s389 + $0x50] sm:$0xff]
        %v447 = vld [vmem:[%s389 + $0x58] sm:$0xff]
        %v448 = vld [vmem:[%s389 + $0x60] sm:$0xff]
        %v449 = vld [vmem:[%s389 + $0x68] sm:$0xff]
        %v450 = vld [vmem:[%s389 + $0x70] sm:$0xff]
        %v451 = vld [vmem:[%s389 + $0x78] sm:$0xff]
        %v452 = vld [vmem:[#allocation6] sm:$0xff]
        %v453 = vld [vmem:[#allocation6 + $0x8] sm:$0xff]
        %v454 = vld [vmem:[#allocation6 + $0x10] sm:$0xff]
        %v455 = vld [vmem:[#allocation6 + $0x18] sm:$0xff]
        %v456 = vld [vmem:[#allocation6 + $0x20] sm:$0xff]
        %v457 = vld [vmem:[#allocation6 + $0x28] sm:$0xff]
        %v458 = vld [vmem:[#allocation6 + $0x30] sm:$0xff]
        %v459 = vld [vmem:[#allocation6 + $0x38] sm:$0xff]
        %v460 = vld [vmem:[#allocation6 + $0x40] sm:$0xff]
        %v461 = vld [vmem:[#allocation6 + $0x48] sm:$0xff]
        %v462 = vld [vmem:[#allocation6 + $0x50] sm:$0xff]
        %v463 = vld [vmem:[#allocation6 + $0x58] sm:$0xff]
        %v464 = vld [vmem:[#allocation6 + $0x60] sm:$0xff]
        %v465 = vld [vmem:[#allocation6 + $0x68] sm:$0xff]
        %v466 = vld [vmem:[#allocation6 + $0x70] sm:$0xff]
        %v467 = vld [vmem:[#allocation6 + $0x78] sm:$0xff]
        %v468 = vld [vmem:[#allocation6 + $0x80] sm:$0xff]
        %v469 = vld [vmem:[#allocation6 + $0x88] sm:$0xff]
        %v470 = vld [vmem:[#allocation6 + $0x90] sm:$0xff]
        %v471 = vld [vmem:[#allocation6 + $0x98] sm:$0xff]
        %v472 = vld [vmem:[#allocation6 + $0xa0] sm:$0xff]
        %v473 = vld [vmem:[#allocation6 + $0xa8] sm:$0xff]
        %v474 = vld [vmem:[#allocation6 + $0xb0] sm:$0xff]
        %v475 = vld [vmem:[#allocation6 + $0xb8] sm:$0xff]
        %v476 = vld [vmem:[#allocation6 + $0xc0] sm:$0xff]
        %v477 = vld [vmem:[#allocation6 + $0xc8] sm:$0xff]
        %v478 = vld [vmem:[#allocation6 + $0xd0] sm:$0xff]
        %v479 = vld [vmem:[#allocation6 + $0xd8] sm:$0xff]
        %v480 = vld [vmem:[#allocation6 + $0xe0] sm:$0xff]
        %v481 = vld [vmem:[#allocation6 + $0xe8] sm:$0xff]
        %v482 = vld [vmem:[#allocation6 + $0xf0] sm:$0xff]
        %v483 = vld [vmem:[#allocation6 + $0xf8] sm:$0xff]
        %v484 = vld [vmem:[%s2] sm:$0x1]
        %v486 = vlaneseq
        %v487 = vshrl.u32 %v486, 7
        %v488 = vsub.s32 0, %v487
        %v489 = vrot.slane %v484, %v488
        %491 = vmatprep.subr.mxu0 0.0
        %492 = vmatpush1.msra.mxu0 %v452
        %493 = vmatprep.subr.mxu0 0.0
        %494 = vmatpush1.msra.mxu0 %v453
        %495 = vmatprep.subr.mxu0 0.0
        %496 = vmatpush1.msra.mxu0 %v454
        %497 = vmatprep.subr.mxu0 0.0
        %498 = vmatpush1.msra.mxu0 %v455
        %499 = vmatprep.subr.mxu0 0.0
        %500 = vmatpush1.msra.mxu0 %v456
        %501 = vmatprep.subr.mxu0 0.0
        %502 = vmatpush1.msra.mxu0 %v457
        %503 = vmatprep.subr.mxu0 0.0
        %504 = vmatpush1.msra.mxu0 %v458
        %505 = vmatprep.subr.mxu0 0.0
        %506 = vmatpush1.msra.mxu0 %v459
        %507 = vmatprep.subr.mxu0 0.0
        %508 = vmatpush1.msra.mxu0 %v460
        %509 = vmatprep.subr.mxu0 0.0
        %510 = vmatpush1.msra.mxu0 %v461
        %511 = vmatprep.subr.mxu0 0.0
        %512 = vmatpush1.msra.mxu0 %v462
        %513 = vmatprep.subr.mxu0 0.0
        %514 = vmatpush1.msra.mxu0 %v463
        %515 = vmatprep.subr.mxu0 0.0
        %516 = vmatpush1.msra.mxu0 %v464
        %517 = vmatprep.subr.mxu0 0.0
        %518 = vmatpush1.msra.mxu0 %v465
        %519 = vmatprep.subr.mxu0 0.0
        %520 = vmatpush1.msra.mxu0 %v466
        %521 = vmatprep.subr.mxu0 0.0
        %522 = vmatpush1.msra.mxu0 %v467
        %523 = vmatprep.subr.mxu0 0.0
        %524 = vmatpush1.msra.mxu0 %v468
        %525 = vmatprep.subr.mxu0 0.0
        %526 = vmatpush1.msra.mxu0 %v469
        %527 = vmatprep.subr.mxu0 0.0
        %528 = vmatpush1.msra.mxu0 %v470
        %529 = vmatprep.subr.mxu0 0.0
        %530 = vmatpush1.msra.mxu0 %v471
        %531 = vmatprep.subr.mxu0 0.0
        %532 = vmatpush1.msra.mxu0 %v472
        %533 = vmatprep.subr.mxu0 0.0
        %534 = vmatpush1.msra.mxu0 %v473
        %535 = vmatprep.subr.mxu0 0.0
        %536 = vmatpush1.msra.mxu0 %v474
        %537 = vmatprep.subr.mxu0 0.0
        %538 = vmatpush1.msra.mxu0 %v475
        %539 = vmatprep.subr.mxu0 0.0
        %540 = vmatpush1.msra.mxu0 %v476
        %541 = vmatprep.subr.mxu0 0.0
        %542 = vmatpush1.msra.mxu0 %v477
        %543 = vmatprep.subr.mxu0 0.0
        %544 = vmatpush1.msra.mxu0 %v478
        %545 = vmatprep.subr.mxu0 0.0
        %546 = vmatpush1.msra.mxu0 %v479
        %547 = vmatprep.subr.mxu0 0.0
        %548 = vmatpush1.msra.mxu0 %v480
        %549 = vmatprep.subr.mxu0 0.0
        %550 = vmatpush1.msra.mxu0 %v481
        %551 = vmatprep.subr.mxu0 0.0
        %552 = vmatpush1.msra.mxu0 %v482
        %553 = vmatprep.subr.mxu0 0.0
        %554 = vmatpush1.msra.mxu0 %v483
        %555 = vmatprep.mubr.f32.mxu0 %v437
        %556 = vmatmul.mubr.f32.gmra.mrb[0].mxu0 %v436
        %v557 = vpop.f32.mrb[0].mxu0
        %v558 = vadd.f32 %v489, %v557
        %v559 = vpop.f32.mrb[0].mxu0
        %560 = vmatprep.mubr.f32.mxu0 %v439
        %561 = vmatmul.mubr.f32.gmra.mrb[0].mxu0 %v438
        %v562 = vpop.f32.mrb[0].mxu0
        %v563 = vadd.f32 %v489, %v562
        %v564 = vpop.f32.mrb[0].mxu0
        %565 = vmatprep.mubr.f32.mxu0 %v441
        %566 = vmatmul.mubr.f32.gmra.mrb[0].mxu0 %v440
        %v567 = vpop.f32.mrb[0].mxu0
        %v568 = vadd.f32 %v489, %v567
        %v569 = vpop.f32.mrb[0].mxu0
        %570 = vmatprep.mubr.f32.mxu0 %v443
        %571 = vmatmul.mubr.f32.gmra.mrb[0].mxu0 %v442
        %v572 = vpop.f32.mrb[0].mxu0
        %v573 = vadd.f32 %v489, %v572
        %v574 = vpop.f32.mrb[0].mxu0
        %575 = vmatprep.mubr.f32.mxu0 %v445
        %576 = vmatmul.mubr.f32.gmra.mrb[0].mxu0 %v444
        %v577 = vpop.f32.mrb[0].mxu0
        %v578 = vadd.f32 %v489, %v577
        %v579 = vpop.f32.mrb[0].mxu0
        %580 = vmatprep.mubr.f32.mxu0 %v447
        %581 = vmatmul.mubr.f32.gmra.mrb[0].mxu0 %v446
        %v582 = vpop.f32.mrb[0].mxu0
        %v583 = vadd.f32 %v489, %v582
        %v584 = vpop.f32.mrb[0].mxu0
        %585 = vmatprep.mubr.f32.mxu0 %v449
        %586 = vmatmul.mubr.f32.gmra.mrb[0].mxu0 %v448
        %v587 = vpop.f32.mrb[0].mxu0
        %v588 = vadd.f32 %v489, %v587
        %v589 = vpop.f32.mrb[0].mxu0
        %590 = vmatprep.mubr.f32.mxu0 %v451
        %591 = vmatmul.mubr.f32.gmra.mrb[0].mxu0 %v450
        %v592 = vpop.f32.mrb[0].mxu0
        %v593 = vadd.f32 %v489, %v592
        %v594 = vpop.f32.mrb[0].mxu0
        %595 = vdwg.mxu0
        %v596 = vld [vmem:[%s3] sm:$0x1]
        %v597 = vld [vmem:[%s4] sm:$0x1]
        %598 = vadd.xlane.f32.xlu0 %v558
        %v599 = vpop.xlane.xlu0 %598
        %600 = vadd.xlane.f32.xlu0 %v563
        %v601 = vpop.xlane.xlu0 %600
        %602 = vadd.xlane.f32.xlu0 %v568
        %v603 = vpop.xlane.xlu0 %602
        %604 = vadd.xlane.f32.xlu0 %v573
        %v605 = vpop.xlane.xlu0 %604
        %606 = vadd.xlane.f32.xlu0 %v578
        %v607 = vpop.xlane.xlu0 %606
        %608 = vadd.xlane.f32.xlu0 %v583
        %v609 = vpop.xlane.xlu0 %608
        %610 = vadd.xlane.f32.xlu0 %v588
        %v611 = vpop.xlane.xlu0 %610
        %612 = vadd.xlane.f32.xlu0 %v593
        %v613 = vpop.xlane.xlu0 %612
        %v614 = vrcp.pop 128.0
        %v615 = vmul.f32 %v599, %v614
        %v616 = vmul.f32 %v601, %v614
        %v617 = vmul.f32 %v603, %v614
        %v618 = vmul.f32 %v605, %v614
        %v619 = vmul.f32 %v607, %v614
        %v620 = vmul.f32 %v609, %v614
        %v621 = vmul.f32 %v611, %v614
        %v622 = vmul.f32 %v613, %v614
        %v623 = vsub.f32 %v558, %v615
        %v624 = vsub.f32 %v563, %v616
        %v625 = vsub.f32 %v568, %v617
        %v626 = vsub.f32 %v573, %v618
        %v627 = vsub.f32 %v578, %v619
        %v628 = vsub.f32 %v583, %v620
        %v629 = vsub.f32 %v588, %v621
        %v630 = vsub.f32 %v593, %v622
        %v631 = vmul.f32 %v623, %v623
        %v632 = vmul.f32 %v624, %v624
        %v633 = vmul.f32 %v625, %v625
        %v634 = vmul.f32 %v626, %v626
        %v635 = vmul.f32 %v627, %v627
        %v636 = vmul.f32 %v628, %v628
        %v637 = vmul.f32 %v629, %v629
        %v638 = vmul.f32 %v630, %v630
        %639 = vadd.xlane.f32.xlu0 %v631
        %v640 = vpop.xlane.xlu0 %639
        %641 = vadd.xlane.f32.xlu0 %v632
        %v642 = vpop.xlane.xlu0 %641
        %643 = vadd.xlane.f32.xlu0 %v633
        %v644 = vpop.xlane.xlu0 %643
        %645 = vadd.xlane.f32.xlu0 %v634
        %v646 = vpop.xlane.xlu0 %645
        %647 = vadd.xlane.f32.xlu0 %v635
        %v648 = vpop.xlane.xlu0 %647
        %649 = vadd.xlane.f32.xlu0 %v636
        %v650 = vpop.xlane.xlu0 %649
        %651 = vadd.xlane.f32.xlu0 %v637
        %v652 = vpop.xlane.xlu0 %651
        %653 = vadd.xlane.f32.xlu0 %v638
        %v654 = vpop.xlane.xlu0 %653
        %v655 = vmul.f32 %v640, %v614
        %v656 = vmul.f32 %v642, %v614
        %v657 = vmul.f32 %v644, %v614
        %v658 = vmul.f32 %v646, %v614
        %v659 = vmul.f32 %v648, %v614
        %v660 = vmul.f32 %v650, %v614
        %v661 = vmul.f32 %v652, %v614
        %v662 = vmul.f32 %v654, %v614
        %v663 = vadd.f32 %v655, 1e-05
        %v664 = vadd.f32 %v656, 1e-05
        %v665 = vadd.f32 %v657, 1e-05
        %v666 = vadd.f32 %v658, 1e-05
        %v667 = vadd.f32 %v659, 1e-05
        %v668 = vadd.f32 %v660, 1e-05
        %v669 = vadd.f32 %v661, 1e-05
        %v670 = vadd.f32 %v662, 1e-05
        %v671 = vrsqrt.pop %v663
        %v672 = vrsqrt.pop %v664
        %v673 = vrsqrt.pop %v665
        %v674 = vrsqrt.pop %v666
        %v675 = vrsqrt.pop %v667
        %v676 = vrsqrt.pop %v668
        %v677 = vrsqrt.pop %v669
        %v678 = vrsqrt.pop %v670
        %v679 = vmul.f32 %v623, %v671
        %v680 = vmul.f32 %v624, %v672
        %v681 = vmul.f32 %v625, %v673
        %v682 = vmul.f32 %v626, %v674
        %v683 = vmul.f32 %v627, %v675
        %v684 = vmul.f32 %v628, %v676
        %v685 = vmul.f32 %v629, %v677
        %v686 = vmul.f32 %v630, %v678
        %v688 = vlaneseq
        %v689 = vshrl.u32 %v688, 7
        %v690 = vsub.s32 0, %v689
        %v691 = vrot.slane %v596, %v690
        %v693 = vmul.f32 %v679, %v691
        %v694 = vmul.f32 %v680, %v691
        %v695 = vmul.f32 %v681, %v691
        %v696 = vmul.f32 %v682, %v691
        %v697 = vmul.f32 %v683, %v691
        %v698 = vmul.f32 %v684, %v691
        %v699 = vmul.f32 %v685, %v691
        %v700 = vmul.f32 %v686, %v691
        %v702 = vlaneseq
        %v703 = vshrl.u32 %v702, 7
        %v704 = vsub.s32 0, %v703
        %v705 = vrot.slane %v597, %v704
        %v707 = vadd.f32 %v693, %v705
        %v708 = vadd.f32 %v694, %v705
        %v709 = vadd.f32 %v695, %v705
        %v710 = vadd.f32 %v696, %v705
        %v711 = vadd.f32 %v697, %v705
        %v712 = vadd.f32 %v698, %v705
        %v713 = vadd.f32 %v699, %v705
        %v714 = vadd.f32 %v700, %v705
        %v715 = vmul.f32 %v707, 0.5
        %v716 = vmul.f32 %v708, 0.5
        %v717 = vmul.f32 %v709, 0.5
        %v718 = vmul.f32 %v710, 0.5
        %v719 = vmul.f32 %v711, 0.5
        %v720 = vmul.f32 %v712, 0.5
        %v721 = vmul.f32 %v713, 0.5
        %v722 = vmul.f32 %v714, 0.5
        %v723 = vmul.f32 %v707, 0.70710677
        %v724 = vmul.f32 %v708, 0.70710677
        %v725 = vmul.f32 %v709, 0.70710677
        %v726 = vmul.f32 %v710, 0.70710677
        %v727 = vmul.f32 %v711, 0.70710677
        %v728 = vmul.f32 %v712, 0.70710677
        %v729 = vmul.f32 %v713, 0.70710677
        %v730 = vmul.f32 %v714, 0.70710677
        %v731 = verf.f32.pop %v723
        %v732 = verf.f32.pop %v724
        %v733 = verf.f32.pop %v725
        %v734 = verf.f32.pop %v726
        %v735 = verf.f32.pop %v727
        %v736 = verf.f32.pop %v728
        %v737 = verf.f32.pop %v729
        %v738 = verf.f32.pop %v730
        %v739 = vadd.f32 %v731, 1.0
        %v740 = vadd.f32 %v732, 1.0
        %v741 = vadd.f32 %v733, 1.0
        %v742 = vadd.f32 %v734, 1.0
        %v743 = vadd.f32 %v735, 1.0
        %v744 = vadd.f32 %v736, 1.0
        %v745 = vadd.f32 %v737, 1.0
        %v746 = vadd.f32 %v738, 1.0
        %v747 = vmul.f32 %v715, %v739
        %v748 = vmul.f32 %v716, %v740
        %v749 = vmul.f32 %v717, %v741
        %v750 = vmul.f32 %v718, %v742
        %v751 = vmul.f32 %v719, %v743
        %v752 = vmul.f32 %v720, %v744
        %v753 = vmul.f32 %v721, %v745
        %v754 = vmul.f32 %v722, %v746
        %v755 = vrot.slane %v747, 4
        %v756 = vadd.f32 %v747, %v755
        %v757 = vrot.slane %v756, 2
        %v758 = vadd.f32 %v756, %v757
        %v759 = vrot.slane %v758, 1
        %v760 = vadd.f32 %v758, %v759
        %v761 = vrot.slane %v748, 4
        %v762 = vadd.f32 %v748, %v761
        %v763 = vrot.slane %v762, 2
        %v764 = vadd.f32 %v762, %v763
        %v765 = vrot.slane %v764, 1
        %v766 = vadd.f32 %v764, %v765
        %v767 = vrot.slane %v749, 4
        %v768 = vadd.f32 %v749, %v767
        %v769 = vrot.slane %v768, 2
        %v770 = vadd.f32 %v768, %v769
        %v771 = vrot.slane %v770, 1
        %v772 = vadd.f32 %v770, %v771
        %v773 = vrot.slane %v750, 4
        %v774 = vadd.f32 %v750, %v773
        %v775 = vrot.slane %v774, 2
        %v776 = vadd.f32 %v774, %v775
        %v777 = vrot.slane %v776, 1
        %v778 = vadd.f32 %v776, %v777
        %v779 = vrot.slane %v751, 4
        %v780 = vadd.f32 %v751, %v779
        %v781 = vrot.slane %v780, 2
        %v782 = vadd.f32 %v780, %v781
        %v783 = vrot.slane %v782, 1
        %v784 = vadd.f32 %v782, %v783
        %v785 = vrot.slane %v752, 4
        %v786 = vadd.f32 %v752, %v785
        %v787 = vrot.slane %v786, 2
        %v788 = vadd.f32 %v786, %v787
        %v789 = vrot.slane %v788, 1
        %v790 = vadd.f32 %v788, %v789
        %v791 = vrot.slane %v753, 4
        %v792 = vadd.f32 %v753, %v791
        %v793 = vrot.slane %v792, 2
        %v794 = vadd.f32 %v792, %v793
        %v795 = vrot.slane %v794, 1
        %v796 = vadd.f32 %v794, %v795
        %v797 = vrot.slane %v754, 4
        %v798 = vadd.f32 %v754, %v797
        %v799 = vrot.slane %v798, 2
        %v800 = vadd.f32 %v798, %v799
        %v801 = vrot.slane %v800, 1
        %v802 = vadd.f32 %v800, %v801
        %v803 = vrcp.pop 8.0
        %v804 = vmul.f32 %v760, %v803
        %v805 = vmul.f32 %v766, %v803
        %v806 = vmul.f32 %v772, %v803
        %v807 = vmul.f32 %v778, %v803
        %v808 = vmul.f32 %v784, %v803
        %v809 = vmul.f32 %v790, %v803
        %v810 = vmul.f32 %v796, %v803
        %v811 = vmul.f32 %v802, %v803
        %v812 = vld [vmem:[#allocation8] sm:$0xff]
        %v813 = vld [vmem:[#allocation8 + $0x8] sm:$0xff]
        %v814 = vld [vmem:[#allocation8 + $0x10] sm:$0xff]
        %v815 = vld [vmem:[#allocation8 + $0x18] sm:$0xff]
        %v816 = vld [vmem:[#allocation8 + $0x20] sm:$0xff]
        %v817 = vld [vmem:[#allocation8 + $0x28] sm:$0xff]
        %v818 = vld [vmem:[#allocation8 + $0x30] sm:$0xff]
        %v819 = vld [vmem:[#allocation8 + $0x38] sm:$0xff]
        %v820 = vld [vmem:[#allocation8 + $0x40] sm:$0xff]
        %v821 = vld [vmem:[#allocation8 + $0x48] sm:$0xff]
        %v822 = vld [vmem:[#allocation8 + $0x50] sm:$0xff]
        %v823 = vld [vmem:[#allocation8 + $0x58] sm:$0xff]
        %v824 = vld [vmem:[#allocation8 + $0x60] sm:$0xff]
        %v825 = vld [vmem:[#allocation8 + $0x68] sm:$0xff]
        %v826 = vld [vmem:[#allocation8 + $0x70] sm:$0xff]
        %v827 = vld [vmem:[#allocation8 + $0x78] sm:$0xff]
        %v828 = vld [vmem:[%s6] sm:$0x1]
        %v830 = vlaneseq
        %v831 = vshrl.u32 %v830, 7
        %v832 = vsub.s32 0, %v831
        %v833 = vrot.slane %v828, %v832
        %vm843 = vcmask 1041409
        %v844 = vsel %vm843, %v805, %v804
        %vm845 = vcmask 1042434
        %v846 = vsel %vm845, %v806, %v844
        %vm847 = vcmask 1043459
        %v848 = vsel %vm847, %v807, %v846
        %vm849 = vcmask 1044484
        %v850 = vsel %vm849, %v808, %v848
        %vm851 = vcmask 1045509
        %v852 = vsel %vm851, %v809, %v850
        %vm853 = vcmask 1046534
        %v854 = vsel %vm853, %v810, %v852
        %vm855 = vcmask 1047559
        %v856 = vsel %vm855, %v811, %v854
        %858 = vmatprep.subr.mxu0 0.0
        %859 = vmatpush1.msra.mxu0 %v812
        %860 = vmatprep.subr.mxu0 0.0
        %861 = vmatpush1.msra.mxu0 %v813
        %862 = vmatprep.subr.mxu0 0.0
        %863 = vmatpush1.msra.mxu0 %v814
        %864 = vmatprep.subr.mxu0 0.0
        %865 = vmatpush1.msra.mxu0 %v815
        %866 = vmatprep.subr.mxu0 0.0
        %867 = vmatpush1.msra.mxu0 %v816
        %868 = vmatprep.subr.mxu0 0.0
        %869 = vmatpush1.msra.mxu0 %v817
        %870 = vmatprep.subr.mxu0 0.0
        %871 = vmatpush1.msra.mxu0 %v818
        %872 = vmatprep.subr.mxu0 0.0
        %873 = vmatpush1.msra.mxu0 %v819
        %874 = vmatprep.subr.mxu0 0.0
        %875 = vmatpush1.msra.mxu0 %v820
        %876 = vmatprep.subr.mxu0 0.0
        %877 = vmatpush1.msra.mxu0 %v821
        %878 = vmatprep.subr.mxu0 0.0
        %879 = vmatpush1.msra.mxu0 %v822
        %880 = vmatprep.subr.mxu0 0.0
        %881 = vmatpush1.msra.mxu0 %v823
        %882 = vmatprep.subr.mxu0 0.0
        %883 = vmatpush1.msra.mxu0 %v824
        %884 = vmatprep.subr.mxu0 0.0
        %885 = vmatpush1.msra.mxu0 %v825
        %886 = vmatprep.subr.mxu0 0.0
        %887 = vmatpush1.msra.mxu0 %v826
        %888 = vmatprep.subr.mxu0 0.0
        %889 = vmatpush1.msra.mxu0 %v827
        %890 = vmatprep.subr.mxu0 0.0
        %891 = vmatpush1.msra.mxu0 0.0
        %892 = vmatprep.subr.mxu0 0.0
        %893 = vmatpush1.msra.mxu0 0.0
        %894 = vmatprep.subr.mxu0 0.0
        %895 = vmatpush1.msra.mxu0 0.0
        %896 = vmatprep.subr.mxu0 0.0
        %897 = vmatpush1.msra.mxu0 0.0
        %898 = vmatprep.subr.mxu0 0.0
        %899 = vmatpush1.msra.mxu0 0.0
        %900 = vmatprep.subr.mxu0 0.0
        %901 = vmatpush1.msra.mxu0 0.0
        %902 = vmatprep.subr.mxu0 0.0
        %903 = vmatpush1.msra.mxu0 0.0
        %904 = vmatprep.subr.mxu0 0.0
        %905 = vmatpush1.msra.mxu0 0.0
        %906 = vmatprep.subr.mxu0 0.0
        %907 = vmatpush1.msra.mxu0 0.0
        %908 = vmatprep.subr.mxu0 0.0
        %909 = vmatpush1.msra.mxu0 0.0
        %910 = vmatprep.subr.mxu0 0.0
        %911 = vmatpush1.msra.mxu0 0.0
        %912 = vmatprep.subr.mxu0 0.0
        %913 = vmatpush1.msra.mxu0 0.0
        %914 = vmatprep.subr.mxu0 0.0
        %915 = vmatpush1.msra.mxu0 0.0
        %916 = vmatprep.subr.mxu0 0.0
        %917 = vmatpush1.msra.mxu0 0.0
        %918 = vmatprep.subr.mxu0 0.0
        %919 = vmatpush1.msra.mxu0 0.0
        %920 = vmatprep.subr.mxu0 0.0
        %921 = vmatpush1.msra.mxu0 0.0
        %922 = vmatprep.mubr.f32.mxu0 0.0
        %923 = vmatmul.mubr.f32.gmra.mrb[0].mxu0 %v856
        %v924 = vpop.f32.mrb[0].mxu0
        %v925 = vadd.f32 %v833, %v924
        %v926 = vpop.f32.mrb[0].mxu0
        %927 = vdwg.mxu0
        %v928 = vld [vmem:[%s7] sm:$0x1]
        %v929 = vld [vmem:[%s8] sm:$0x1]
        %930 = vadd.xlane.f32.xlu0 %v925
        %v931 = vpop.xlane.xlu0 %930
        %v932 = vmul.f32 %v931, %v614
        %v933 = vsub.f32 %v925, %v932
        %v934 = vmul.f32 %v933, %v933
        %935 = vadd.xlane.f32.xlu0 %v934
        %v936 = vpop.xlane.xlu0 %935
        %v937 = vmul.f32 %v936, %v614
        %v938 = vadd.f32 %v937, 1e-05
        %v939 = vrsqrt.pop %v938
        %v940 = vmul.f32 %v933, %v939
        %v942 = vlaneseq
        %v943 = vshrl.u32 %v942, 7
        %v944 = vsub.s32 0, %v943
        %v945 = vrot.slane %v928, %v944
        %v947 = vmul.f32 %v940, %v945
        %v949 = vlaneseq
        %v950 = vshrl.u32 %v949, 7
        %v951 = vsub.s32 0, %v950
        %v952 = vrot.slane %v929, %v951
        %v954 = vadd.f32 %v947, %v952
        %v955 = vmul.f32 %v954, 0.5
        %v956 = vmul.f32 %v954, 0.70710677
        %v957 = verf.f32.pop %v956
        %v958 = vadd.f32 %v957, 1.0
        %v959 = vmul.f32 %v955, %v958
        %v960 = vld [vmem:[%s9] sm:$0x1]
        %v962 = vlaneseq
        %v963 = vshrl.u32 %v962, 7
        %v964 = vsub.s32 0, %v963
        %v965 = vrot.slane %v960, %v964
        %v967 = vmul.f32 %v959, %v965
        %968 = vadd.xlane.f32.xlu0 %v967
        %v969 = vpop.xlane.xlu0 %968
        %s970 = sld [smem:[#allocation2]]
        %v971 = vstv %s970
        %v972 = vadd.f32 %v969, %v971
        %v974 = vlaneseq
        %v975 = vand.u32 %v974, 127
        %v976 = vlaneseq
        %v977 = vshrl.u32 %v976, 7
        %v978 = vsub.s32 %v975, %v977
        %v979 = vrot.slane %v972, %v978
        %vm981 = vcmask 57344
        %982 = vst.msk [vmem:[%s434] sm:$0x1] %vm981, %v979
        %s983 = sand.u32 %s274, 1
        %s984 = scalar_lea.sflag [#allocation5], %s983
        %s985 = sand.u32 %s274, 1
        %s986 = scalar_lea.vmem [#allocation9], %s985
        // Predicated region
        $region77: #{tpu_custom_call.1} parent=63 // pred_check
          %p987 = pneg %p284
        $region78: #{tpu_custom_call.1} parent=63 // pred_check_branch
          %989 = sbr.rel (%p987) target = $region80
        $region79: #{tpu_custom_call.1} parent=63 // pred_region
          %s991 = ssub.s32 16, 16
          %992 = vsyncadd %s984, %s991
          %s993 = smul.addr %s30, 16
          %s994 = scalar_lea.hbm %s11, %s993
          %s996 = sshll.u32 %s986, 4
          %s997 = int_to_ptr.vmem [resolvable:$true] %s996
          %999 = dma.vmem_to_hbm [thread:$0]  %s997, 16, %s994, %s984
        $region80: #{tpu_custom_call.1} parent=63 // pred_fallthru
          _
      $region64: #{tpu_custom_call.1} parent=5 // pred_fallthru
        _
      %p1000 = scmp.le.s32.totalorder 2, %s25
      // Predicated region
      $region81: #{tpu_custom_call.1} parent=5 // pred_check
        %p1001 = pneg %p1000
      $region82: #{tpu_custom_call.1} parent=5 // pred_check_branch
        %1003 = sbr.rel (%p1001) target = $region84
      $region83: #{tpu_custom_call.1} parent=5 // pred_region
        %s1004 = ssub.s32 %s25, 2
        // Predicated region
        $region85: #{tpu_custom_call.1} parent=83 // pred_check
          %p1005 = pneg %p290
        $region86: #{tpu_custom_call.1} parent=83 // pred_check_branch
          %1007 = sbr.rel (%p1005) target = $region88
        $region87: #{tpu_custom_call.1} parent=83 // pred_region
          %s1008 = sand.u32 %s275, 1
          %s1009 = scalar_lea.sflag [#allocation5], %s1008
          %s1010 = sand.u32 %s275, 1
          %s1011 = scalar_lea.vmem [#allocation9], %s1010
          %1012 = dma.done %s1009, 16
        $region88: #{tpu_custom_call.1} parent=83 // pred_fallthru
          _
      $region84: #{tpu_custom_call.1} parent=5 // pred_fallthru
        _
    $region6: #{tpu_custom_call.1} parent=1 // loop_footer
      %s29 = sadd.s32 1, %s25
    $region7: #{tpu_custom_call.1} parent=1 // loop_footer_branch
      %24 = sbr.rel target = $region3
    $region8: #{tpu_custom_call.1} parent=1 // loop_exit
      _
    %1013 = vsyncpa [#allocation4], 1
    %s1014 = scalar_lea.sflag [#allocation4], 1
    %1015 = vsyncpa %s1014, 1
    %1016 = vsyncpa [#allocation7], 1
    %1017 = vsyncpa [#allocation5], 1
    %s1018 = scalar_lea.sflag [#allocation5], 1
    %1019 = vsyncpa %s1018, 1

// kernel: tpu_custom_call.1
$region0: #{tpu_custom_call.1}
  #allocation0 [shape = 'u32[]', space=smem, size = 0x4, offset = 0x4, fixed_abs, tag = 'smem constant byte address 0x4 - core index']
  #allocation1 [shape = 'u32[144,128]{1,0:T(1,128)}', space=vmem, size = 0x12000, scoped, tag = 'internal scratch']
  #allocation2 [shape = 'f32[1,1]{1,0:T(1,128)S(6)}', space=smem, size = 0x200, scoped, tag = 'scoped memory for tpu_custom_call.1']
  %s0 = inlined_call_operand.hbm [shape: f32[128,256], index: 0, kind: input, shape index: {}]
  %s1 = inlined_call_operand.hbm [shape: f32[256,128], index: 1, kind: input, shape index: {}]
  %s2 = inlined_call_operand.vmem [shape: f32[1,128], index: 2, kind: input, shape index: {}]
  %s3 = inlined_call_operand.vmem [shape: f32[1,128], index: 3, kind: input, shape index: {}]
  %s4 = inlined_call_operand.vmem [shape: f32[1,128], index: 4, kind: input, shape index: {}]
  %s5 = inlined_call_operand.hbm [shape: f32[128,128], index: 5, kind: input, shape index: {}]
  %s6 = inlined_call_operand.vmem [shape: f32[1,128], index: 6, kind: input, shape index: {}]
  %s7 = inlined_call_operand.vmem [shape: f32[1,128], index: 7, kind: input, shape index: {}]
  %s8 = inlined_call_operand.vmem [shape: f32[1,128], index: 8, kind: input, shape index: {}]
  %s9 = inlined_call_operand.vmem [shape: f32[1,128], index: 9, kind: input, shape index: {}]
  %s10 = inlined_call_operand.<no memory space> [shape: f32[1,1], index: 10, kind: input, shape index: {}]
  %s11 = inlined_call_operand.hbm [shape: f32[2,1,8], index: 11, kind: output, shape index: {}]
  %s12 = sld [smem:[#allocation0]]
  $region89: #{tpu_custom_call.1} parent=0
    _
  %s14 = ssub.s32 1, %s12
  %s15 = scalar_select 0, %s14, %s12
  %16 = sst [smem:[#allocation2]] %s10
  $region1: #{tpu_custom_call.1} parent=0
    #allocation3 [shape = 'u8[131072]{0}', space=vmem, size = 0x20000, scoped, tag = 'input window, operand 0']
    #allocation4 [shape = 's32[2]{0}', space=sflag, size = 0x8, scoped, tag = 'scoped memory for tpu_custom_call.1']
    #allocation5 [shape = 's32[2]{0}', space=sflag, size = 0x8, scoped, tag = 'scoped memory for tpu_custom_call.1']
    #allocation6 [shape = 'u8[131072]{0}', space=vmem, size = 0x20000, scoped, tag = 'input window, operand 1, single buffered']
    #allocation7 [shape = 's32[1]{0}', space=sflag, size = 0x4, scoped, tag = 'scoped memory for tpu_custom_call.1']
    #allocation8 [shape = 'u8[65536]{0}', space=vmem, size = 0x10000, scoped, tag = 'input window, operand 5, single buffered']
    #allocation9 [shape = 'u8[1024]{0}', space=vmem, size = 0x400, scoped, tag = 'output window, operand 0']
    %17 = vsyncpa [#allocation4], 0
    %s18 = scalar_lea.sflag [#allocation4], 1
    %19 = vsyncpa %s18, 0
    %20 = vsyncpa [#allocation7], 0
    %21 = vsyncpa [#allocation5], 0
    %s22 = scalar_lea.sflag [#allocation5], 1
    %23 = vsyncpa %s22, 0
    loop: start=0, step=1, limit=4
    $region2: #{tpu_custom_call.1} parent=1 // loop_pre_header
      _
    $region3: #{tpu_custom_call.1} parent=1 // loop_header
      %s25 = sphi 0, %s29
      %p26 = scmp.ge.s32.totalorder %s25, 4
      %s35 = sphi 0, %s37
      %s38 = sphi 0, %s35
      %s39 = sphi 0, %s38
      %s55 = sphi 0, %s39
      %s59 = sphi 0, %s59
      %s61 = sphi 0, %s59
      %s62 = sphi 0, %s61
      %s76 = sphi 0, %s62
      %s80 = sphi 0, %s80
      %s82 = sphi 0, %s80
      %s83 = sphi 0, %s82
      %s97 = sphi 0, %s83
      %s101 = sphi 0, %s101
      %s103 = sphi 0, %s101
      %s104 = sphi 0, %s103
      %s118 = sphi 0, %s104
      %s122 = sphi 0, %s122
      %s124 = sphi 0, %s122
      %s125 = sphi 0, %s124
      %s139 = sphi 0, %s125
      %s143 = sphi 0, %s143
      %s145 = sphi 0, %s143
      %s146 = sphi 0, %s145
      %s160 = sphi 0, %s146
      %s164 = sphi 0, %s164
      %s166 = sphi 0, %s164
      %s167 = sphi 0, %s166
      %s181 = sphi 0, %s167
      %s185 = sphi 0, %s185
      %s187 = sphi 0, %s185
      %s188 = sphi 0, %s187
      %s202 = sphi 0, %s188
      %s206 = sphi 0, %s206
      %s208 = sphi 0, %s206
      %s209 = sphi 0, %s208
      %s223 = sphi 0, %s209
      %s227 = sphi 0, %s227
      %s229 = sphi 0, %s227
      %s230 = sphi 0, %s229
      %s244 = sphi 0, %s230
      %s248 = sphi 0, %s248
      %s250 = sphi 0, %s248
      %s251 = sphi 0, %s250
      %s265 = sphi 0, %s251
      %s271 = sphi 0, %s273
      %s274 = sphi 0, %s271
      %s275 = sphi 0, %s274
      %s291 = sphi 0, %s275
    $region4: #{tpu_custom_call.1} parent=1 // loop_header_branch
      %28 = sbr.rel (%p26) target = $region8
    $region5: #{tpu_custom_call.1} parent=1 // loop_body
      %s30 = ssub.s32 %s25, 1
      %s31 = ssub.s32 %s25, 2
      %s32 = sadd.s32 %s25, 1
      %s33 = ssub.s32 %s25, %s32
      %p34 = scmp.eq.s32.totalorder %s33, 0
      %s36 = sadd.s32 %s35, 1
      %s37 = scalar_select %p34, %s35, %s36
      %p40 = pneg %p34
      %p41 = scmp.eq.s32.totalorder %s25, 1
      %p42 = por %p40, %p41
      %p43 = scmp.ne.s32.totalorder %s35, %s38
      %p44 = scmp.eq.s32.totalorder %s25, 0
      %p45 = por %p43, %p44
      %p46 = scmp.ne.s32.totalorder %s35, %s38
      %p47 = scmp.eq.s32.totalorder %s30, 1
      %p48 = por %p46, %p47
      %p49 = scmp.ne.s32.totalorder %s38, %s39
      %p50 = scmp.eq.s32.totalorder %s30, 0
      %p51 = por %p49, %p50
      %p52 = scmp.ne.s32.totalorder %s38, %s39
      %p53 = scmp.eq.s32.totalorder %s31, 1
      %p54 = por %p52, %p53
      %p56 = scmp.ne.s32.totalorder %s39, %s55
      %p57 = scmp.eq.s32.totalorder %s31, 0
      %p58 = por %p56, %p57
      %s60 = sadd.s32 %s59, 1
      %p63 = scmp.eq.s32.totalorder %s25, 1
      %p64 = scmp.ne.s32.totalorder %s59, %s61
      %p65 = scmp.eq.s32.totalorder %s25, 0
      %p66 = por %p64, %p65
      %p67 = scmp.ne.s32.totalorder %s59, %s61
      %p68 = scmp.eq.s32.totalorder %s30, 1
      %p69 = por %p67, %p68
      %p70 = scmp.ne.s32.totalorder %s61, %s62
      %p71 = scmp.eq.s32.totalorder %s30, 0
      %p72 = por %p70, %p71
      %p73 = scmp.ne.s32.totalorder %s61, %s62
      %p74 = scmp.eq.s32.totalorder %s31, 1
      %p75 = por %p73, %p74
      %p77 = scmp.ne.s32.totalorder %s62, %s76
      %p78 = scmp.eq.s32.totalorder %s31, 0
      %p79 = por %p77, %p78
      %s81 = sadd.s32 %s80, 1
      %p84 = scmp.eq.s32.totalorder %s25, 1
      %p85 = scmp.ne.s32.totalorder %s80, %s82
      %p86 = scmp.eq.s32.totalorder %s25, 0
      %p87 = por %p85, %p86
      %p88 = scmp.ne.s32.totalorder %s80, %s82
      %p89 = scmp.eq.s32.totalorder %s30, 1
      %p90 = por %p88, %p89
      %p91 = scmp.ne.s32.totalorder %s82, %s83
      %p92 = scmp.eq.s32.totalorder %s30, 0
      %p93 = por %p91, %p92
      %p94 = scmp.ne.s32.totalorder %s82, %s83
      %p95 = scmp.eq.s32.totalorder %s31, 1
      %p96 = por %p94, %p95
      %p98 = scmp.ne.s32.totalorder %s83, %s97
      %p99 = scmp.eq.s32.totalorder %s31, 0
      %p100 = por %p98, %p99
      %s102 = sadd.s32 %s101, 1
      %p105 = scmp.eq.s32.totalorder %s25, 1
      %p106 = scmp.ne.s32.totalorder %s101, %s103
      %p107 = scmp.eq.s32.totalorder %s25, 0
      %p108 = por %p106, %p107
      %p109 = scmp.ne.s32.totalorder %s101, %s103
      %p110 = scmp.eq.s32.totalorder %s30, 1
      %p111 = por %p109, %p110
      %p112 = scmp.ne.s32.totalorder %s103, %s104
      %p113 = scmp.eq.s32.totalorder %s30, 0
      %p114 = por %p112, %p113
      %p115 = scmp.ne.s32.totalorder %s103, %s104
      %p116 = scmp.eq.s32.totalorder %s31, 1
      %p117 = por %p115, %p116
      %p119 = scmp.ne.s32.totalorder %s104, %s118
      %p120 = scmp.eq.s32.totalorder %s31, 0
      %p121 = por %p119, %p120
      %s123 = sadd.s32 %s122, 1
      %p126 = scmp.eq.s32.totalorder %s25, 1
      %p127 = scmp.ne.s32.totalorder %s122, %s124
      %p128 = scmp.eq.s32.totalorder %s25, 0
      %p129 = por %p127, %p128
      %p130 = scmp.ne.s32.totalorder %s122, %s124
      %p131 = scmp.eq.s32.totalorder %s30, 1
      %p132 = por %p130, %p131
      %p133 = scmp.ne.s32.totalorder %s124, %s125
      %p134 = scmp.eq.s32.totalorder %s30, 0
      %p135 = por %p133, %p134
      %p136 = scmp.ne.s32.totalorder %s124, %s125
      %p137 = scmp.eq.s32.totalorder %s31, 1
      %p138 = por %p136, %p137
      %p140 = scmp.ne.s32.totalorder %s125, %s139
      %p141 = scmp.eq.s32.totalorder %s31, 0
      %p142 = por %p140, %p141
      %s144 = sadd.s32 %s143, 1
      %p147 = scmp.eq.s32.totalorder %s25, 1
      %p148 = scmp.ne.s32.totalorder %s143, %s145
      %p149 = scmp.eq.s32.totalorder %s25, 0
      %p150 = por %p148, %p149
      %p151 = scmp.ne.s32.totalorder %s143, %s145
      %p152 = scmp.eq.s32.totalorder %s30, 1
      %p153 = por %p151, %p152
      %p154 = scmp.ne.s32.totalorder %s145, %s146
      %p155 = scmp.eq.s32.totalorder %s30, 0
      %p156 = por %p154, %p155
      %p157 = scmp.ne.s32.totalorder %s145, %s146
      %p158 = scmp.eq.s32.totalorder %s31, 1
      %p159 = por %p157, %p158
      %p161 = scmp.ne.s32.totalorder %s146, %s160
      %p162 = scmp.eq.s32.totalorder %s31, 0
      %p163 = por %p161, %p162
      %s165 = sadd.s32 %s164, 1
      %p168 = scmp.eq.s32.totalorder %s25, 1
      %p169 = scmp.ne.s32.totalorder %s164, %s166
      %p170 = scmp.eq.s32.totalorder %s25, 0
      %p171 = por %p169, %p170
      %p172 = scmp.ne.s32.totalorder %s164, %s166
      %p173 = scmp.eq.s32.totalorder %s30, 1
      %p174 = por %p172, %p173
      %p175 = scmp.ne.s32.totalorder %s166, %s167
      %p176 = scmp.eq.s32.totalorder %s30, 0
      %p177 = por %p175, %p176
      %p178 = scmp.ne.s32.totalorder %s166, %s167
      %p179 = scmp.eq.s32.totalorder %s31, 1
      %p180 = por %p178, %p179
      %p182 = scmp.ne.s32.totalorder %s167, %s181
      %p183 = scmp.eq.s32.totalorder %s31, 0
      %p184 = por %p182, %p183
      %s186 = sadd.s32 %s185, 1
      %p189 = scmp.eq.s32.totalorder %s25, 1
      %p190 = scmp.ne.s32.totalorder %s185, %s187
      %p191 = scmp.eq.s32.totalorder %s25, 0
      %p192 = por %p190, %p191
      %p193 = scmp.ne.s32.totalorder %s185, %s187
      %p194 = scmp.eq.s32.totalorder %s30, 1
      %p195 = por %p193, %p194
      %p196 = scmp.ne.s32.totalorder %s187, %s188
      %p197 = scmp.eq.s32.totalorder %s30, 0
      %p198 = por %p196, %p197
      %p199 = scmp.ne.s32.totalorder %s187, %s188
      %p200 = scmp.eq.s32.totalorder %s31, 1
      %p201 = por %p199, %p200
      %p203 = scmp.ne.s32.totalorder %s188, %s202
      %p204 = scmp.eq.s32.totalorder %s31, 0
      %p205 = por %p203, %p204
      %s207 = sadd.s32 %s206, 1
      %p210 = scmp.eq.s32.totalorder %s25, 1
      %p211 = scmp.ne.s32.totalorder %s206, %s208
      %p212 = scmp.eq.s32.totalorder %s25, 0
      %p213 = por %p211, %p212
      %p214 = scmp.ne.s32.totalorder %s206, %s208
      %p215 = scmp.eq.s32.totalorder %s30, 1
      %p216 = por %p214, %p215
      %p217 = scmp.ne.s32.totalorder %s208, %s209
      %p218 = scmp.eq.s32.totalorder %s30, 0
      %p219 = por %p217, %p218
      %p220 = scmp.ne.s32.totalorder %s208, %s209
      %p221 = scmp.eq.s32.totalorder %s31, 1
      %p222 = por %p220, %p221
      %p224 = scmp.ne.s32.totalorder %s209, %s223
      %p225 = scmp.eq.s32.totalorder %s31, 0
      %p226 = por %p224, %p225
      %s228 = sadd.s32 %s227, 1
      %p231 = scmp.eq.s32.totalorder %s25, 1
      %p232 = scmp.ne.s32.totalorder %s227, %s229
      %p233 = scmp.eq.s32.totalorder %s25, 0
      %p234 = por %p232, %p233
      %p235 = scmp.ne.s32.totalorder %s227, %s229
      %p236 = scmp.eq.s32.totalorder %s30, 1
      %p237 = por %p235, %p236
      %p238 = scmp.ne.s32.totalorder %s229, %s230
      %p239 = scmp.eq.s32.totalorder %s30, 0
      %p240 = por %p238, %p239
      %p241 = scmp.ne.s32.totalorder %s229, %s230
      %p242 = scmp.eq.s32.totalorder %s31, 1
      %p243 = por %p241, %p242
      %p245 = scmp.ne.s32.totalorder %s230, %s244
      %p246 = scmp.eq.s32.totalorder %s31, 0
      %p247 = por %p245, %p246
      %s249 = sadd.s32 %s248, 1
      %p252 = scmp.eq.s32.totalorder %s25, 1
      %p253 = scmp.ne.s32.totalorder %s248, %s250
      %p254 = scmp.eq.s32.totalorder %s25, 0
      %p255 = por %p253, %p254
      %p256 = scmp.ne.s32.totalorder %s248, %s250
      %p257 = scmp.eq.s32.totalorder %s30, 1
      %p258 = por %p256, %p257
      %p259 = scmp.ne.s32.totalorder %s250, %s251
      %p260 = scmp.eq.s32.totalorder %s30, 0
      %p261 = por %p259, %p260
      %p262 = scmp.ne.s32.totalorder %s250, %s251
      %p263 = scmp.eq.s32.totalorder %s31, 1
      %p264 = por %p262, %p263
      %p266 = scmp.ne.s32.totalorder %s251, %s265
      %p267 = scmp.eq.s32.totalorder %s31, 0
      %p268 = por %p266, %p267
      %s269 = ssub.s32 %s25, %s32
      %p270 = scmp.eq.s32.totalorder %s269, 0
      %s272 = sadd.s32 %s271, 1
      %s273 = scalar_select %p270, %s271, %s272
      %p276 = pneg %p270
      %p277 = scmp.eq.s32.totalorder %s25, 1
      %p278 = por %p276, %p277
      %p279 = scmp.ne.s32.totalorder %s271, %s274
      %p280 = scmp.eq.s32.totalorder %s25, 0
      %p281 = por %p279, %p280
      %p282 = scmp.ne.s32.totalorder %s271, %s274
      %p283 = scmp.eq.s32.totalorder %s30, 1
      %p284 = por %p282, %p283
      %p285 = scmp.ne.s32.totalorder %s274, %s275
      %p286 = scmp.eq.s32.totalorder %s30, 0
      %p287 = por %p285, %p286
      %p288 = scmp.ne.s32.totalorder %s274, %s275
      %p289 = scmp.eq.s32.totalorder %s31, 1
      %p290 = por %p288, %p289
      %p292 = scmp.ne.s32.totalorder %s275, %s291
      %p293 = scmp.eq.s32.totalorder %s31, 0
      %p294 = por %p292, %p293
      %p295 = scmp.le.s32.totalorder 1, %s25
      %p296 = scmp.lt.s32.totalorder %s25, 3
      %p297 = pnand %p295, %p296
      %p298 = pneg %p297
      // Predicated region
      $region9: #{tpu_custom_call.1} parent=5 // pred_check
        _
      $region10: #{tpu_custom_call.1} parent=5 // pred_check_branch
        %300 = sbr.rel (%p297) target = $region12
      $region11: #{tpu_custom_call.1} parent=5 // pred_region
        %s301 = ssub.s32 %s25, 1
        // Predicated region
        $region13: #{tpu_custom_call.1} parent=11 // pred_check
          %p302 = pneg %p72
        $region14: #{tpu_custom_call.1} parent=11 // pred_check_branch
          %304 = sbr.rel (%p302) target = $region16
        $region15: #{tpu_custom_call.1} parent=11 // pred_region
          %s306 = ssub.s32 4096, 4096
          %307 = vsyncadd [#allocation7], %s306
          %s308 = sshll.u32 [#allocation6], 4
          %s309 = int_to_ptr.vmem [resolvable:$true] %s308
          %314 = dma.hbm_to_vmem [thread:$0]  %s1, 4096, %s309, [#allocation7], 128, 128, 8
        $region16: #{tpu_custom_call.1} parent=11 // pred_fallthru
          _
        // Predicated region
        $region17: #{tpu_custom_call.1} parent=11 // pred_check
          %p315 = pneg %p93
        $region18: #{tpu_custom_call.1} parent=11 // pred_check_branch
          %317 = sbr.rel (%p315) target = $region20
        $region19: #{tpu_custom_call.1} parent=11 // pred_region
          _
        $region20: #{tpu_custom_call.1} parent=11 // pred_fallthru
          _
        // Predicated region
        $region21: #{tpu_custom_call.1} parent=11 // pred_check
          %p318 = pneg %p114
        $region22: #{tpu_custom_call.1} parent=11 // pred_check_branch
          %320 = sbr.rel (%p318) target = $region24
        $region23: #{tpu_custom_call.1} parent=11 // pred_region
          _
        $region24: #{tpu_custom_call.1} parent=11 // pred_fallthru
          _
        // Predicated region
        $region25: #{tpu_custom_call.1} parent=11 // pred_check
          %p321 = pneg %p135
        $region26: #{tpu_custom_call.1} parent=11 // pred_check_branch
          %323 = sbr.rel (%p321) target = $region28
        $region27: #{tpu_custom_call.1} parent=11 // pred_region
          _
        $region28: #{tpu_custom_call.1} parent=11 // pred_fallthru
          _
        // Predicated region
        $region29: #{tpu_custom_call.1} parent=11 // pred_check
          %p324 = pneg %p156
        $region30: #{tpu_custom_call.1} parent=11 // pred_check_branch
          %326 = sbr.rel (%p324) target = $region32
        $region31: #{tpu_custom_call.1} parent=11 // pred_region
          %s328 = ssub.s32 2048, 2048
          %329 = vsyncadd [#allocation7], %s328
          %s330 = sshll.u32 [#allocation8], 4
          %s331 = int_to_ptr.vmem [resolvable:$true] %s330
          %336 = dma.hbm_to_vmem [thread:$0]  %s5, 2048, %s331, [#allocation7], 128, 128, 8
        $region32: #{tpu_custom_call.1} parent=11 // pred_fallthru
          _
        // Predicated region
        $region33: #{tpu_custom_call.1} parent=11 // pred_check
          %p337 = pneg %p177
        $region34: #{tpu_custom_call.1} parent=11 // pred_check_branch
          %339 = sbr.rel (%p337) target = $region36
        $region35: #{tpu_custom_call.1} parent=11 // pred_region
          _
        $region36: #{tpu_custom_call.1} parent=11 // pred_fallthru
          _
        // Predicated region
        $region37: #{tpu_custom_call.1} parent=11 // pred_check
          %p340 = pneg %p198
        $region38: #{tpu_custom_call.1} parent=11 // pred_check_branch
          %342 = sbr.rel (%p340) target = $region40
        $region39: #{tpu_custom_call.1} parent=11 // pred_region
          _
        $region40: #{tpu_custom_call.1} parent=11 // pred_fallthru
          _
        // Predicated region
        $region41: #{tpu_custom_call.1} parent=11 // pred_check
          %p343 = pneg %p219
        $region42: #{tpu_custom_call.1} parent=11 // pred_check_branch
          %345 = sbr.rel (%p343) target = $region44
        $region43: #{tpu_custom_call.1} parent=11 // pred_region
          _
        $region44: #{tpu_custom_call.1} parent=11 // pred_fallthru
          _
        // Predicated region
        $region45: #{tpu_custom_call.1} parent=11 // pred_check
          %p346 = pneg %p240
        $region46: #{tpu_custom_call.1} parent=11 // pred_check_branch
          %348 = sbr.rel (%p346) target = $region48
        $region47: #{tpu_custom_call.1} parent=11 // pred_region
          _
        $region48: #{tpu_custom_call.1} parent=11 // pred_fallthru
          _
        // Predicated region
        $region49: #{tpu_custom_call.1} parent=11 // pred_check
          %p349 = pneg %p261
        $region50: #{tpu_custom_call.1} parent=11 // pred_check_branch
          %351 = sbr.rel (%p349) target = $region52
        $region51: #{tpu_custom_call.1} parent=11 // pred_region
          _
        $region52: #{tpu_custom_call.1} parent=11 // pred_fallthru
          _
      $region12: #{tpu_custom_call.1} parent=5 // pred_fallthru
        _
      %p352 = scmp.lt.s32.totalorder %s25, 2
      // Predicated region
      $region53: #{tpu_custom_call.1} parent=5 // pred_check
        %p353 = pneg %p352
      $region54: #{tpu_custom_call.1} parent=5 // pred_check_branch
        %355 = sbr.rel (%p353) target = $region56
      $region55: #{tpu_custom_call.1} parent=5 // pred_region
        // Predicated region
        $region57: #{tpu_custom_call.1} parent=55 // pred_check
          %p356 = pneg %p45
        $region58: #{tpu_custom_call.1} parent=55 // pred_check_branch
          %358 = sbr.rel (%p356) target = $region60
        $region59: #{tpu_custom_call.1} parent=55 // pred_region
          %s359 = sand.u32 %s35, 1
          %s360 = scalar_lea.sflag [#allocation4], %s359
          %s361 = sand.u32 %s35, 1
          %s362 = smul.addr %s361, 128
          %s363 = scalar_lea.vmem [#allocation3], %s362
          %s364 = smul.u32 8, %s25
          %s366 = ssub.s32 2048, 2048
          %367 = vsyncadd %s360, %s366
          %s368 = smul.addr %s364, 2
          %s369 = smul.addr %s368, 128
          %s370 = scalar_lea.hbm %s0, %s369
          %s371 = sshll.u32 %s363, 4
          %s372 = int_to_ptr.vmem [resolvable:$true] %s371
          %377 = dma.hbm_to_vmem [thread:$0]  %s370, 2048, %s372, %s360, 256, 256, 16
        $region60: #{tpu_custom_call.1} parent=55 // pred_fallthru
          _
      $region56: #{tpu_custom_call.1} parent=5 // pred_fallthru
        _
      %p378 = scmp.le.s32.totalorder 1, %s25
      %p379 = scmp.lt.s32.totalorder %s25, 3
      %p380 = pnand %p378, %p379
      %p381 = pneg %p380
      // Predicated region
      $region61: #{tpu_custom_call.1} parent=5 // pred_check
        _
      $region62: #{tpu_custom_call.1} parent=5 // pred_check_branch
        %383 = sbr.rel (%p380) target = $region64
      $region63: #{tpu_custom_call.1} parent=5 // pred_region
        %s384 = ssub.s32 %s25, 1
        %s385 = sand.u32 %s38, 1
        %s386 = scalar_lea.sflag [#allocation4], %s385
        %s387 = sand.u32 %s38, 1
        %s388 = smul.addr %s387, 128
        %s389 = scalar_lea.vmem [#allocation3], %s388
        // Predicated region
        $region65: #{tpu_custom_call.1} parent=63 // pred_check
          %p390 = pneg %p51
        $region66: #{tpu_custom_call.1} parent=63 // pred_check_branch
          %392 = sbr.rel (%p390) target = $region68
        $region67: #{tpu_custom_call.1} parent=63 // pred_region
          %393 = dma.done %s386, 2048
        $region68: #{tpu_custom_call.1} parent=63 // pred_fallthru
          _
        // Predicated region
        $region69: #{tpu_custom_call.1} parent=63 // pred_check
          %p394 = pneg %p72
        $region70: #{tpu_custom_call.1} parent=63 // pred_check_branch
          %396 = sbr.rel (%p394) target = $region72
        $region71: #{tpu_custom_call.1} parent=63 // pred_region
          %397 = dma.done [#allocation7], 4096
        $region72: #{tpu_custom_call.1} parent=63 // pred_fallthru
          _
        // Predicated region
        $region73: #{tpu_custom_call.1} parent=63 // pred_check
          %p398 = pneg %p156
        $region74: #{tpu_custom_call.1} parent=63 // pred_check_branch
          %400 = sbr.rel (%p398) target = $region76
        $region75: #{tpu_custom_call.1} parent=63 // pred_region
          %401 = dma.done [#allocation7], 2048
        $region76: #{tpu_custom_call.1} parent=63 // pred_fallthru
          _
        %s402 = sand.u32 %s38, 1
        %s403 = scalar_lea.sflag [#allocation4], %s402
        %s404 = sand.u32 %s38, 1
        %s405 = smul.addr %s404, 128
        %s406 = scalar_lea.vmem [#allocation3], %s405
        %p407 = pneg %p51
        %p408 = pneg %p48
        %p409 = pneg %p72
        %p410 = pneg %p69
        %p411 = pneg %p93
        %p412 = pneg %p90
        %p413 = pneg %p114
        %p414 = pneg %p111
        %p415 = pneg %p135
        %p416 = pneg %p132
        %p417 = pneg %p156
        %p418 = pneg %p153
        %p419 = pneg %p177
        %p420 = pneg %p174
        %p421 = pneg %p198
        %p422 = pneg %p195
        %p423 = pneg %p219
        %p424 = pneg %p216
        %p425 = pneg %p240
        %p426 = pneg %p237
        %p427 = pneg %p261
        %p428 = pneg %p258
        %p429 = pneg %p287
        %p430 = pneg %p284
        %s431 = sand.u32 %s274, 1
        %s432 = scalar_lea.sflag [#allocation5], %s431
        %s433 = sand.u32 %s274, 1
        %s434 = scalar_lea.vmem [#allocation9], %s433
        %s435 = smul.u32 8, %s30
        %v436 = vld [vmem:[%s389] sm:$0xff]
        %v437 = vld [vmem:[%s389 + $0x8] sm:$0xff]
        %v438 = vld [vmem:[%s389 + $0x10] sm:$0xff]
        %v439 = vld [vmem:[%s389 + $0x18] sm:$0xff]
        %v440 = vld [vmem:[%s389 + $0x20] sm:$0xff]
        %v441 = vld [vmem:[%s389 + $0x28] sm:$0xff]
        %v442 = vld [vmem:[%s389 + $0x30] sm:$0xff]
        %v443 = vld [vmem:[%s389 + $0x38] sm:$0xff]
        %v444 = vld [vmem:[%s389 + $0x40] sm:$0xff]
        %v445 = vld [vmem:[%s389 + $0x48] sm:$0xff]
        %v446 = vld [vmem:[%s389 + $0x50] sm:$0xff]
        %v447 = vld [vmem:[%s389 + $0x58] sm:$0xff]
        %v448 = vld [vmem:[%s389 + $0x60] sm:$0xff]
        %v449 = vld [vmem:[%s389 + $0x68] sm:$0xff]
        %v450 = vld [vmem:[%s389 + $0x70] sm:$0xff]
        %v451 = vld [vmem:[%s389 + $0x78] sm:$0xff]
        %v452 = vld [vmem:[#allocation6] sm:$0xff]
        %v453 = vld [vmem:[#allocation6 + $0x8] sm:$0xff]
        %v454 = vld [vmem:[#allocation6 + $0x10] sm:$0xff]
        %v455 = vld [vmem:[#allocation6 + $0x18] sm:$0xff]
        %v456 = vld [vmem:[#allocation6 + $0x20] sm:$0xff]
        %v457 = vld [vmem:[#allocation6 + $0x28] sm:$0xff]
        %v458 = vld [vmem:[#allocation6 + $0x30] sm:$0xff]
        %v459 = vld [vmem:[#allocation6 + $0x38] sm:$0xff]
        %v460 = vld [vmem:[#allocation6 + $0x40] sm:$0xff]
        %v461 = vld [vmem:[#allocation6 + $0x48] sm:$0xff]
        %v462 = vld [vmem:[#allocation6 + $0x50] sm:$0xff]
        %v463 = vld [vmem:[#allocation6 + $0x58] sm:$0xff]
        %v464 = vld [vmem:[#allocation6 + $0x60] sm:$0xff]
        %v465 = vld [vmem:[#allocation6 + $0x68] sm:$0xff]
        %v466 = vld [vmem:[#allocation6 + $0x70] sm:$0xff]
        %v467 = vld [vmem:[#allocation6 + $0x78] sm:$0xff]
        %v468 = vld [vmem:[#allocation6 + $0x80] sm:$0xff]
        %v469 = vld [vmem:[#allocation6 + $0x88] sm:$0xff]
        %v470 = vld [vmem:[#allocation6 + $0x90] sm:$0xff]
        %v471 = vld [vmem:[#allocation6 + $0x98] sm:$0xff]
        %v472 = vld [vmem:[#allocation6 + $0xa0] sm:$0xff]
        %v473 = vld [vmem:[#allocation6 + $0xa8] sm:$0xff]
        %v474 = vld [vmem:[#allocation6 + $0xb0] sm:$0xff]
        %v475 = vld [vmem:[#allocation6 + $0xb8] sm:$0xff]
        %v476 = vld [vmem:[#allocation6 + $0xc0] sm:$0xff]
        %v477 = vld [vmem:[#allocation6 + $0xc8] sm:$0xff]
        %v478 = vld [vmem:[#allocation6 + $0xd0] sm:$0xff]
        %v479 = vld [vmem:[#allocation6 + $0xd8] sm:$0xff]
        %v480 = vld [vmem:[#allocation6 + $0xe0] sm:$0xff]
        %v481 = vld [vmem:[#allocation6 + $0xe8] sm:$0xff]
        %v482 = vld [vmem:[#allocation6 + $0xf0] sm:$0xff]
        %v483 = vld [vmem:[#allocation6 + $0xf8] sm:$0xff]
        %v484 = vld [vmem:[%s2] sm:$0x1]
        %v486 = vlaneseq
        %v487 = vshrl.u32 %v486, 7
        %v488 = vsub.s32 0, %v487
        %v489 = vrot.slane %v484, %v488
        %491 = vmatprep.subr.mxu0 0.0
        %492 = vmatpush1.msra.mxu0 %v452
        %493 = vmatprep.subr.mxu0 0.0
        %494 = vmatpush1.msra.mxu0 %v453
        %495 = vmatprep.subr.mxu0 0.0
        %496 = vmatpush1.msra.mxu0 %v454
        %497 = vmatprep.subr.mxu0 0.0
        %498 = vmatpush1.msra.mxu0 %v455
        %499 = vmatprep.subr.mxu0 0.0
        %500 = vmatpush1.msra.mxu0 %v456
        %501 = vmatprep.subr.mxu0 0.0
        %502 = vmatpush1.msra.mxu0 %v457
        %503 = vmatprep.subr.mxu0 0.0
        %504 = vmatpush1.msra.mxu0 %v458
        %505 = vmatprep.subr.mxu0 0.0
        %506 = vmatpush1.msra.mxu0 %v459
        %507 = vmatprep.subr.mxu0 0.0
        %508 = vmatpush1.msra.mxu0 %v460
        %509 = vmatprep.subr.mxu0 0.0
        %510 = vmatpush1.msra.mxu0 %v461
        %511 = vmatprep.subr.mxu0 0.0
        %512 = vmatpush1.msra.mxu0 %v462
        %513 = vmatprep.subr.mxu0 0.0
        %514 = vmatpush1.msra.mxu0 %v463
        %515 = vmatprep.subr.mxu0 0.0
        %516 = vmatpush1.msra.mxu0 %v464
        %517 = vmatprep.subr.mxu0 0.0
        %518 = vmatpush1.msra.mxu0 %v465
        %519 = vmatprep.subr.mxu0 0.0
        %520 = vmatpush1.msra.mxu0 %v466
        %521 = vmatprep.subr.mxu0 0.0
        %522 = vmatpush1.msra.mxu0 %v467
        %523 = vmatprep.subr.mxu0 0.0
        %524 = vmatpush1.msra.mxu0 %v468
        %525 = vmatprep.subr.mxu0 0.0
        %526 = vmatpush1.msra.mxu0 %v469
        %527 = vmatprep.subr.mxu0 0.0
        %528 = vmatpush1.msra.mxu0 %v470
        %529 = vmatprep.subr.mxu0 0.0
        %530 = vmatpush1.msra.mxu0 %v471
        %531 = vmatprep.subr.mxu0 0.0
        %532 = vmatpush1.msra.mxu0 %v472
        %533 = vmatprep.subr.mxu0 0.0
        %534 = vmatpush1.msra.mxu0 %v473
        %535 = vmatprep.subr.mxu0 0.0
        %536 = vmatpush1.msra.mxu0 %v474
        %537 = vmatprep.subr.mxu0 0.0
        %538 = vmatpush1.msra.mxu0 %v475
        %539 = vmatprep.subr.mxu0 0.0
        %540 = vmatpush1.msra.mxu0 %v476
        %541 = vmatprep.subr.mxu0 0.0
        %542 = vmatpush1.msra.mxu0 %v477
        %543 = vmatprep.subr.mxu0 0.0
        %544 = vmatpush1.msra.mxu0 %v478
        %545 = vmatprep.subr.mxu0 0.0
        %546 = vmatpush1.msra.mxu0 %v479
        %547 = vmatprep.subr.mxu0 0.0
        %548 = vmatpush1.msra.mxu0 %v480
        %549 = vmatprep.subr.mxu0 0.0
        %550 = vmatpush1.msra.mxu0 %v481
        %551 = vmatprep.subr.mxu0 0.0
        %552 = vmatpush1.msra.mxu0 %v482
        %553 = vmatprep.subr.mxu0 0.0
        %554 = vmatpush1.msra.mxu0 %v483
        %555 = vmatprep.mubr.f32.mxu0 %v437
        %556 = vmatmul.mubr.f32.gmra.mrb[0].mxu0 %v436
        %v557 = vpop.f32.mrb[0].mxu0
        %v558 = vadd.f32 %v489, %v557
        %v559 = vpop.f32.mrb[0].mxu0
        %560 = vmatprep.mubr.f32.mxu0 %v439
        %561 = vmatmul.mubr.f32.gmra.mrb[0].mxu0 %v438
        %v562 = vpop.f32.mrb[0].mxu0
        %v563 = vadd.f32 %v489, %v562
        %v564 = vpop.f32.mrb[0].mxu0
        %565 = vmatprep.mubr.f32.mxu0 %v441
        %566 = vmatmul.mubr.f32.gmra.mrb[0].mxu0 %v440
        %v567 = vpop.f32.mrb[0].mxu0
        %v568 = vadd.f32 %v489, %v567
        %v569 = vpop.f32.mrb[0].mxu0
        %570 = vmatprep.mubr.f32.mxu0 %v443
        %571 = vmatmul.mubr.f32.gmra.mrb[0].mxu0 %v442
        %v572 = vpop.f32.mrb[0].mxu0
        %v573 = vadd.f32 %v489, %v572
        %v574 = vpop.f32.mrb[0].mxu0
        %575 = vmatprep.mubr.f32.mxu0 %v445
        %576 = vmatmul.mubr.f32.gmra.mrb[0].mxu0 %v444
        %v577 = vpop.f32.mrb[0].mxu0
        %v578 = vadd.f32 %v489, %v577
        %v579 = vpop.f32.mrb[0].mxu0
        %580 = vmatprep.mubr.f32.mxu0 %v447
        %581 = vmatmul.mubr.f32.gmra.mrb[0].mxu0 %v446
        %v582 = vpop.f32.mrb[0].mxu0
        %v583 = vadd.f32 %v489, %v582
        %v584 = vpop.f32.mrb[0].mxu0
        %585 = vmatprep.mubr.f32.mxu0 %v449
        %586 = vmatmul.mubr.f32.gmra.mrb[0].mxu0 %v448
        %v587 = vpop.f32.mrb[0].mxu0
        %v588 = vadd.f32 %v489, %v587
        %v589 = vpop.f32.mrb[0].mxu0
        %590 = vmatprep.mubr.f32.mxu0 %v451
        %591 = vmatmul.mubr.f32.gmra.mrb[0].mxu0 %v450
        %v592 = vpop.f32.mrb[0].mxu0
        %v593 = vadd.f32 %v489, %v592
        %v594 = vpop.f32.mrb[0].mxu0
        %595 = vdwg.mxu0
        %v596 = vld [vmem:[%s3] sm:$0x1]
        %v597 = vld [vmem:[%s4] sm:$0x1]
        %598 = vadd.xlane.f32.xlu0 %v558
        %v599 = vpop.xlane.xlu0 %598
        %600 = vadd.xlane.f32.xlu0 %v563
        %v601 = vpop.xlane.xlu0 %600
        %602 = vadd.xlane.f32.xlu0 %v568
        %v603 = vpop.xlane.xlu0 %602
        %604 = vadd.xlane.f32.xlu0 %v573
        %v605 = vpop.xlane.xlu0 %604
        %606 = vadd.xlane.f32.xlu0 %v578
        %v607 = vpop.xlane.xlu0 %606
        %608 = vadd.xlane.f32.xlu0 %v583
        %v609 = vpop.xlane.xlu0 %608
        %610 = vadd.xlane.f32.xlu0 %v588
        %v611 = vpop.xlane.xlu0 %610
        %612 = vadd.xlane.f32.xlu0 %v593
        %v613 = vpop.xlane.xlu0 %612
        %v614 = vrcp.pop 128.0
        %v615 = vmul.f32 %v599, %v614
        %v616 = vmul.f32 %v601, %v614
        %v617 = vmul.f32 %v603, %v614
        %v618 = vmul.f32 %v605, %v614
        %v619 = vmul.f32 %v607, %v614
        %v620 = vmul.f32 %v609, %v614
        %v621 = vmul.f32 %v611, %v614
        %v622 = vmul.f32 %v613, %v614
        %v623 = vsub.f32 %v558, %v615
        %v624 = vsub.f32 %v563, %v616
        %v625 = vsub.f32 %v568, %v617
        %v626 = vsub.f32 %v573, %v618
        %v627 = vsub.f32 %v578, %v619
        %v628 = vsub.f32 %v583, %v620
        %v629 = vsub.f32 %v588, %v621
        %v630 = vsub.f32 %v593, %v622
        %v631 = vmul.f32 %v623, %v623
        %v632 = vmul.f32 %v624, %v624
        %v633 = vmul.f32 %v625, %v625
        %v634 = vmul.f32 %v626, %v626
        %v635 = vmul.f32 %v627, %v627
        %v636 = vmul.f32 %v628, %v628
        %v637 = vmul.f32 %v629, %v629
        %v638 = vmul.f32 %v630, %v630
        %639 = vadd.xlane.f32.xlu0 %v631
        %v640 = vpop.xlane.xlu0 %639
        %641 = vadd.xlane.f32.xlu0 %v632
        %v642 = vpop.xlane.xlu0 %641
        %643 = vadd.xlane.f32.xlu0 %v633
        %v644 = vpop.xlane.xlu0 %643
        %645 = vadd.xlane.f32.xlu0 %v634
        %v646 = vpop.xlane.xlu0 %645
        %647 = vadd.xlane.f32.xlu0 %v635
        %v648 = vpop.xlane.xlu0 %647
        %649 = vadd.xlane.f32.xlu0 %v636
        %v650 = vpop.xlane.xlu0 %649
        %651 = vadd.xlane.f32.xlu0 %v637
        %v652 = vpop.xlane.xlu0 %651
        %653 = vadd.xlane.f32.xlu0 %v638
        %v654 = vpop.xlane.xlu0 %653
        %v655 = vmul.f32 %v640, %v614
        %v656 = vmul.f32 %v642, %v614
        %v657 = vmul.f32 %v644, %v614
        %v658 = vmul.f32 %v646, %v614
        %v659 = vmul.f32 %v648, %v614
        %v660 = vmul.f32 %v650, %v614
        %v661 = vmul.f32 %v652, %v614
        %v662 = vmul.f32 %v654, %v614
        %v663 = vadd.f32 %v655, 1e-05
        %v664 = vadd.f32 %v656, 1e-05
        %v665 = vadd.f32 %v657, 1e-05
        %v666 = vadd.f32 %v658, 1e-05
        %v667 = vadd.f32 %v659, 1e-05
        %v668 = vadd.f32 %v660, 1e-05
        %v669 = vadd.f32 %v661, 1e-05
        %v670 = vadd.f32 %v662, 1e-05
        %v671 = vrsqrt.pop %v663
        %v672 = vrsqrt.pop %v664
        %v673 = vrsqrt.pop %v665
        %v674 = vrsqrt.pop %v666
        %v675 = vrsqrt.pop %v667
        %v676 = vrsqrt.pop %v668
        %v677 = vrsqrt.pop %v669
        %v678 = vrsqrt.pop %v670
        %v679 = vmul.f32 %v623, %v671
        %v680 = vmul.f32 %v624, %v672
        %v681 = vmul.f32 %v625, %v673
        %v682 = vmul.f32 %v626, %v674
        %v683 = vmul.f32 %v627, %v675
        %v684 = vmul.f32 %v628, %v676
        %v685 = vmul.f32 %v629, %v677
        %v686 = vmul.f32 %v630, %v678
        %v688 = vlaneseq
        %v689 = vshrl.u32 %v688, 7
        %v690 = vsub.s32 0, %v689
        %v691 = vrot.slane %v596, %v690
        %v693 = vmul.f32 %v679, %v691
        %v694 = vmul.f32 %v680, %v691
        %v695 = vmul.f32 %v681, %v691
        %v696 = vmul.f32 %v682, %v691
        %v697 = vmul.f32 %v683, %v691
        %v698 = vmul.f32 %v684, %v691
        %v699 = vmul.f32 %v685, %v691
        %v700 = vmul.f32 %v686, %v691
        %v702 = vlaneseq
        %v703 = vshrl.u32 %v702, 7
        %v704 = vsub.s32 0, %v703
        %v705 = vrot.slane %v597, %v704
        %v707 = vadd.f32 %v693, %v705
        %v708 = vadd.f32 %v694, %v705
        %v709 = vadd.f32 %v695, %v705
        %v710 = vadd.f32 %v696, %v705
        %v711 = vadd.f32 %v697, %v705
        %v712 = vadd.f32 %v698, %v705
        %v713 = vadd.f32 %v699, %v705
        %v714 = vadd.f32 %v700, %v705
        %v715 = vmul.f32 %v707, 0.5
        %v716 = vmul.f32 %v708, 0.5
        %v717 = vmul.f32 %v709, 0.5
        %v718 = vmul.f32 %v710, 0.5
        %v719 = vmul.f32 %v711, 0.5
        %v720 = vmul.f32 %v712, 0.5
        %v721 = vmul.f32 %v713, 0.5
        %v722 = vmul.f32 %v714, 0.5
        %v723 = vmul.f32 %v707, 0.70710677
        %v724 = vmul.f32 %v708, 0.70710677
        %v725 = vmul.f32 %v709, 0.70710677
        %v726 = vmul.f32 %v710, 0.70710677
        %v727 = vmul.f32 %v711, 0.70710677
        %v728 = vmul.f32 %v712, 0.70710677
        %v729 = vmul.f32 %v713, 0.70710677
        %v730 = vmul.f32 %v714, 0.70710677
        %v731 = verf.f32.pop %v723
        %v732 = verf.f32.pop %v724
        %v733 = verf.f32.pop %v725
        %v734 = verf.f32.pop %v726
        %v735 = verf.f32.pop %v727
        %v736 = verf.f32.pop %v728
        %v737 = verf.f32.pop %v729
        %v738 = verf.f32.pop %v730
        %v739 = vadd.f32 %v731, 1.0
        %v740 = vadd.f32 %v732, 1.0
        %v741 = vadd.f32 %v733, 1.0
        %v742 = vadd.f32 %v734, 1.0
        %v743 = vadd.f32 %v735, 1.0
        %v744 = vadd.f32 %v736, 1.0
        %v745 = vadd.f32 %v737, 1.0
        %v746 = vadd.f32 %v738, 1.0
        %v747 = vmul.f32 %v715, %v739
        %v748 = vmul.f32 %v716, %v740
        %v749 = vmul.f32 %v717, %v741
        %v750 = vmul.f32 %v718, %v742
        %v751 = vmul.f32 %v719, %v743
        %v752 = vmul.f32 %v720, %v744
        %v753 = vmul.f32 %v721, %v745
        %v754 = vmul.f32 %v722, %v746
        %v755 = vrot.slane %v747, 4
        %v756 = vadd.f32 %v747, %v755
        %v757 = vrot.slane %v756, 2
        %v758 = vadd.f32 %v756, %v757
        %v759 = vrot.slane %v758, 1
        %v760 = vadd.f32 %v758, %v759
        %v761 = vrot.slane %v748, 4
        %v762 = vadd.f32 %v748, %v761
        %v763 = vrot.slane %v762, 2
        %v764 = vadd.f32 %v762, %v763
        %v765 = vrot.slane %v764, 1
        %v766 = vadd.f32 %v764, %v765
        %v767 = vrot.slane %v749, 4
        %v768 = vadd.f32 %v749, %v767
        %v769 = vrot.slane %v768, 2
        %v770 = vadd.f32 %v768, %v769
        %v771 = vrot.slane %v770, 1
        %v772 = vadd.f32 %v770, %v771
        %v773 = vrot.slane %v750, 4
        %v774 = vadd.f32 %v750, %v773
        %v775 = vrot.slane %v774, 2
        %v776 = vadd.f32 %v774, %v775
        %v777 = vrot.slane %v776, 1
        %v778 = vadd.f32 %v776, %v777
        %v779 = vrot.slane %v751, 4
        %v780 = vadd.f32 %v751, %v779
        %v781 = vrot.slane %v780, 2
        %v782 = vadd.f32 %v780, %v781
        %v783 = vrot.slane %v782, 1
        %v784 = vadd.f32 %v782, %v783
        %v785 = vrot.slane %v752, 4
        %v786 = vadd.f32 %v752, %v785
        %v787 = vrot.slane %v786, 2
        %v788 = vadd.f32 %v786, %v787
        %v789 = vrot.slane %v788, 1
        %v790 = vadd.f32 %v788, %v789
        %v791 = vrot.slane %v753, 4
        %v792 = vadd.f32 %v753, %v791
        %v793 = vrot.slane %v792, 2
        %v794 = vadd.f32 %v792, %v793
        %v795 = vrot.slane %v794, 1
        %v796 = vadd.f32 %v794, %v795
        %v797 = vrot.slane %v754, 4
        %v798 = vadd.f32 %v754, %v797
        %v799 = vrot.slane %v798, 2
        %v800 = vadd.f32 %v798, %v799
        %v801 = vrot.slane %v800, 1
        %v802 = vadd.f32 %v800, %v801
        %v803 = vrcp.pop 8.0
        %v804 = vmul.f32 %v760, %v803
        %v805 = vmul.f32 %v766, %v803
        %v806 = vmul.f32 %v772, %v803
        %v807 = vmul.f32 %v778, %v803
        %v808 = vmul.f32 %v784, %v803
        %v809 = vmul.f32 %v790, %v803
        %v810 = vmul.f32 %v796, %v803
        %v811 = vmul.f32 %v802, %v803
        %v812 = vld [vmem:[#allocation8] sm:$0xff]
        %v813 = vld [vmem:[#allocation8 + $0x8] sm:$0xff]
        %v814 = vld [vmem:[#allocation8 + $0x10] sm:$0xff]
        %v815 = vld [vmem:[#allocation8 + $0x18] sm:$0xff]
        %v816 = vld [vmem:[#allocation8 + $0x20] sm:$0xff]
        %v817 = vld [vmem:[#allocation8 + $0x28] sm:$0xff]
        %v818 = vld [vmem:[#allocation8 + $0x30] sm:$0xff]
        %v819 = vld [vmem:[#allocation8 + $0x38] sm:$0xff]
        %v820 = vld [vmem:[#allocation8 + $0x40] sm:$0xff]
        %v821 = vld [vmem:[#allocation8 + $0x48] sm:$0xff]
        %v822 = vld [vmem:[#allocation8 + $0x50] sm:$0xff]
        %v823 = vld [vmem:[#allocation8 + $0x58] sm:$0xff]
        %v824 = vld [vmem:[#allocation8 + $0x60] sm:$0xff]
        %v825 = vld [vmem:[#allocation8 + $0x68] sm:$0xff]
        %v826 = vld [vmem:[#allocation8 + $0x70] sm:$0xff]
        %v827 = vld [vmem:[#allocation8 + $0x78] sm:$0xff]
        %v828 = vld [vmem:[%s6] sm:$0x1]
        %v830 = vlaneseq
        %v831 = vshrl.u32 %v830, 7
        %v832 = vsub.s32 0, %v831
        %v833 = vrot.slane %v828, %v832
        %vm843 = vcmask 1041409
        %v844 = vsel %vm843, %v805, %v804
        %vm845 = vcmask 1042434
        %v846 = vsel %vm845, %v806, %v844
        %vm847 = vcmask 1043459
        %v848 = vsel %vm847, %v807, %v846
        %vm849 = vcmask 1044484
        %v850 = vsel %vm849, %v808, %v848
        %vm851 = vcmask 1045509
        %v852 = vsel %vm851, %v809, %v850
        %vm853 = vcmask 1046534
        %v854 = vsel %vm853, %v810, %v852
        %vm855 = vcmask 1047559
        %v856 = vsel %vm855, %v811, %v854
        %858 = vmatprep.subr.mxu0 0.0
        %859 = vmatpush1.msra.mxu0 %v812
        %860 = vmatprep.subr.mxu0 0.0
        %861 = vmatpush1.msra.mxu0 %v813
        %862 = vmatprep.subr.mxu0 0.0
        %863 = vmatpush1.msra.mxu0 %v814
        %864 = vmatprep.subr.mxu0 0.0
        %865 = vmatpush1.msra.mxu0 %v815
        %866 = vmatprep.subr.mxu0 0.0
        %867 = vmatpush1.msra.mxu0 %v816
        %868 = vmatprep.subr.mxu0 0.0
        %869 = vmatpush1.msra.mxu0 %v817
        %870 = vmatprep.subr.mxu0 0.0
        %871 = vmatpush1.msra.mxu0 %v818
        %872 = vmatprep.subr.mxu0 0.0
        %873 = vmatpush1.msra.mxu0 %v819
        %874 = vmatprep.subr.mxu0 0.0
        %875 = vmatpush1.msra.mxu0 %v820
        %876 = vmatprep.subr.mxu0 0.0
        %877 = vmatpush1.msra.mxu0 %v821
        %878 = vmatprep.subr.mxu0 0.0
        %879 = vmatpush1.msra.mxu0 %v822
        %880 = vmatprep.subr.mxu0 0.0
        %881 = vmatpush1.msra.mxu0 %v823
        %882 = vmatprep.subr.mxu0 0.0
        %883 = vmatpush1.msra.mxu0 %v824
        %884 = vmatprep.subr.mxu0 0.0
        %885 = vmatpush1.msra.mxu0 %v825
        %886 = vmatprep.subr.mxu0 0.0
        %887 = vmatpush1.msra.mxu0 %v826
        %888 = vmatprep.subr.mxu0 0.0
        %889 = vmatpush1.msra.mxu0 %v827
        %890 = vmatprep.subr.mxu0 0.0
        %891 = vmatpush1.msra.mxu0 0.0
        %892 = vmatprep.subr.mxu0 0.0
        %893 = vmatpush1.msra.mxu0 0.0
        %894 = vmatprep.subr.mxu0 0.0
        %895 = vmatpush1.msra.mxu0 0.0
        %896 = vmatprep.subr.mxu0 0.0
        %897 = vmatpush1.msra.mxu0 0.0
        %898 = vmatprep.subr.mxu0 0.0
        %899 = vmatpush1.msra.mxu0 0.0
        %900 = vmatprep.subr.mxu0 0.0
        %901 = vmatpush1.msra.mxu0 0.0
        %902 = vmatprep.subr.mxu0 0.0
        %903 = vmatpush1.msra.mxu0 0.0
        %904 = vmatprep.subr.mxu0 0.0
        %905 = vmatpush1.msra.mxu0 0.0
        %906 = vmatprep.subr.mxu0 0.0
        %907 = vmatpush1.msra.mxu0 0.0
        %908 = vmatprep.subr.mxu0 0.0
        %909 = vmatpush1.msra.mxu0 0.0
        %910 = vmatprep.subr.mxu0 0.0
        %911 = vmatpush1.msra.mxu0 0.0
        %912 = vmatprep.subr.mxu0 0.0
        %913 = vmatpush1.msra.mxu0 0.0
        %914 = vmatprep.subr.mxu0 0.0
        %915 = vmatpush1.msra.mxu0 0.0
        %916 = vmatprep.subr.mxu0 0.0
        %917 = vmatpush1.msra.mxu0 0.0
        %918 = vmatprep.subr.mxu0 0.0
        %919 = vmatpush1.msra.mxu0 0.0
        %920 = vmatprep.subr.mxu0 0.0
        %921 = vmatpush1.msra.mxu0 0.0
        %922 = vmatprep.mubr.f32.mxu0 0.0
        %923 = vmatmul.mubr.f32.gmra.mrb[0].mxu0 %v856
        %v924 = vpop.f32.mrb[0].mxu0
        %v925 = vadd.f32 %v833, %v924
        %v926 = vpop.f32.mrb[0].mxu0
        %927 = vdwg.mxu0
        %v928 = vld [vmem:[%s7] sm:$0x1]
        %v929 = vld [vmem:[%s8] sm:$0x1]
        %930 = vadd.xlane.f32.xlu0 %v925
        %v931 = vpop.xlane.xlu0 %930
        %v932 = vmul.f32 %v931, %v614
        %v933 = vsub.f32 %v925, %v932
        %v934 = vmul.f32 %v933, %v933
        %935 = vadd.xlane.f32.xlu0 %v934
        %v936 = vpop.xlane.xlu0 %935
        %v937 = vmul.f32 %v936, %v614
        %v938 = vadd.f32 %v937, 1e-05
        %v939 = vrsqrt.pop %v938
        %v940 = vmul.f32 %v933, %v939
        %v942 = vlaneseq
        %v943 = vshrl.u32 %v942, 7
        %v944 = vsub.s32 0, %v943
        %v945 = vrot.slane %v928, %v944
        %v947 = vmul.f32 %v940, %v945
        %v949 = vlaneseq
        %v950 = vshrl.u32 %v949, 7
        %v951 = vsub.s32 0, %v950
        %v952 = vrot.slane %v929, %v951
        %v954 = vadd.f32 %v947, %v952
        %v955 = vmul.f32 %v954, 0.5
        %v956 = vmul.f32 %v954, 0.70710677
        %v957 = verf.f32.pop %v956
        %v958 = vadd.f32 %v957, 1.0
        %v959 = vmul.f32 %v955, %v958
        %v960 = vld [vmem:[%s9] sm:$0x1]
        %v962 = vlaneseq
        %v963 = vshrl.u32 %v962, 7
        %v964 = vsub.s32 0, %v963
        %v965 = vrot.slane %v960, %v964
        %v967 = vmul.f32 %v959, %v965
        %968 = vadd.xlane.f32.xlu0 %v967
        %v969 = vpop.xlane.xlu0 %968
        %s970 = sld [smem:[#allocation2]]
        %v971 = vstv %s970
        %v972 = vadd.f32 %v969, %v971
        %v974 = vlaneseq
        %v975 = vand.u32 %v974, 127
        %v976 = vlaneseq
        %v977 = vshrl.u32 %v976, 7
        %v978 = vsub.s32 %v975, %v977
        %v979 = vrot.slane %v972, %v978
        %vm981 = vcmask 57344
        %982 = vst.msk [vmem:[%s434] sm:$0x1] %vm981, %v979
        %s983 = sand.u32 %s274, 1
        %s984 = scalar_lea.sflag [#allocation5], %s983
        %s985 = sand.u32 %s274, 1
        %s986 = scalar_lea.vmem [#allocation9], %s985
        // Predicated region
        $region77: #{tpu_custom_call.1} parent=63 // pred_check
          %p987 = pneg %p284
        $region78: #{tpu_custom_call.1} parent=63 // pred_check_branch
          %989 = sbr.rel (%p987) target = $region80
        $region79: #{tpu_custom_call.1} parent=63 // pred_region
          %s991 = ssub.s32 16, 16
          %992 = vsyncadd %s984, %s991
          %s993 = smul.addr %s30, 16
          %s994 = scalar_lea.hbm %s11, %s993
          %s996 = sshll.u32 %s986, 4
          %s997 = int_to_ptr.vmem [resolvable:$true] %s996
          %999 = dma.vmem_to_hbm [thread:$0]  %s997, 16, %s994, %s984
        $region80: #{tpu_custom_call.1} parent=63 // pred_fallthru
          _
      $region64: #{tpu_custom_call.1} parent=5 // pred_fallthru
        _
      %p1000 = scmp.le.s32.totalorder 2, %s25
      // Predicated region
      $region81: #{tpu_custom_call.1} parent=5 // pred_check
        %p1001 = pneg %p1000
      $region82: #{tpu_custom_call.1} parent=5 // pred_check_branch
        %1003 = sbr.rel (%p1001) target = $region84
      $region83: #{tpu_custom_call.1} parent=5 // pred_region
        %s1004 = ssub.s32 %s25, 2
        // Predicated region
        $region85: #{tpu_custom_call.1} parent=83 // pred_check
          %p1005 = pneg %p290
        $region86: #{tpu_custom_call.1} parent=83 // pred_check_branch
          %1007 = sbr.rel (%p1005) target = $region88
        $region87: #{tpu_custom_call.1} parent=83 // pred_region
          %s1008 = sand.u32 %s275, 1
          %s1009 = scalar_lea.sflag [#allocation5], %s1008
          %s1010 = sand.u32 %s275, 1
          %s1011 = scalar_lea.vmem [#allocation9], %s1010
          %1012 = dma.done %s1009, 16
        $region88: #{tpu_custom_call.1} parent=83 // pred_fallthru
          _
      $region84: #{tpu_custom_call.1} parent=5 // pred_fallthru
        _
    $region6: #{tpu_custom_call.1} parent=1 // loop_footer
      %s29 = sadd.s32 1, %s25
    $region7: #{tpu_custom_call.1} parent=1 // loop_footer_branch
      %24 = sbr.rel target = $region3
    $region8: #{tpu_custom_call.1} parent=1 // loop_exit
      _
    %1013 = vsyncpa [#allocation4], 1
    %s1014 = scalar_lea.sflag [#allocation4], 1
    %1015 = vsyncpa %s1014, 1
    %1016 = vsyncpa [#allocation7], 1
    %1017 = vsyncpa [#allocation5], 1
    %s1018 = scalar_lea.sflag [#allocation5], 1
    %1019 = vsyncpa %s1018, 1

</llo_original>
